<compile_context>
chip_gen: v7x
topology: tpu7x:2x2x1
jax: 0.10.0
libtpu: 0.0.40
codegen_flags: <defaults>
</compile_context>

<pallas_src>
import functools

import jax
import jax.numpy as jnp
from jax.experimental import pallas as pl
from jax.experimental.pallas import tpu as pltpu


def _fused_mha_kernel(x_ref, w_qkv_ref, w_proj_ref, b_proj_ref, o_ref, *,
                      num_heads):
    """All heads (causal attention) + output projection for a batch block.

    x_ref:      (Bb, T, C)  bf16 activations
    w_qkv_ref:  (C, 3*C)    bf16 packed [Wq*scale | Wk | Wv], head-major columns
    w_proj_ref: (C, C)      bf16 output projection weight (in, out)
    b_proj_ref: (1, C)      f32 output projection bias
    o_ref:      (Bb, T, C)  lane-dense f32 output block
    """
    Bb, T, C = x_ref.shape
    hs = C // num_heads

    # One wide QKV matmul on the MXU over all fused batch rows
    # (bf16 operands, f32 accumulate), then a single cast back to bf16.
    x = x_ref[...].reshape(Bb * T, C)                                  # bf16
    qkv = jnp.dot(x, w_qkv_ref[...],
                  preferred_element_type=jnp.float32)                 # (Bb*T, 3C)
    qkv = qkv.astype(jnp.bfloat16)

    # Additive causal mask bias, shared across heads / batch rows.
    row = jax.lax.broadcasted_iota(jnp.int32, (T, T), 0)
    col = jax.lax.broadcasted_iota(jnp.int32, (T, T), 1)
    mask_bias = jnp.where(col <= row, 0.0, -1e30).astype(jnp.float32)

    w_proj = w_proj_ref[...]                                           # bf16 (C, C)
    bias = b_proj_ref[...]                                             # f32 (1, C)

    for b in range(Bb):                       # small static batch-block loop
        q_b = qkv[b * T:(b + 1) * T, 0 * C:1 * C]                      # (T, C)
        k_b = qkv[b * T:(b + 1) * T, 1 * C:2 * C]
        v_b = qkv[b * T:(b + 1) * T, 2 * C:3 * C]

        acc = jnp.zeros((T, C), jnp.float32)  # fused per-head projection acc
        for h in range(num_heads):            # static unroll (H is small)
            q_h = q_b[:, h * hs:(h + 1) * hs]                          # (T, hs) bf16
            k_h = k_b[:, h * hs:(h + 1) * hs]
            v_h = v_b[:, h * hs:(h + 1) * hs]

            # q @ k^T without materializing an explicit transpose of k.
            wei = jax.lax.dot_general(
                q_h, k_h,
                dimension_numbers=(((1,), (1,)), ((), ())),
                preferred_element_type=jnp.float32)                    # (T, T) f32
            wei = wei + mask_bias

            # softmax over the last dim (f32 math; reciprocal on the EUP).
            wei = wei - jnp.max(wei, axis=-1, keepdims=True)
            p = jnp.exp(wei)
            p = p * pl.reciprocal(jnp.sum(p, axis=-1, keepdims=True),
                                  approx=True)
            # TODO(synk): attention/proj dropout omitted (identity at inference).

            head = jnp.dot(p.astype(jnp.bfloat16), v_h,
                           preferred_element_type=jnp.float32)         # (T, hs)

            # Project this head straight into the output accumulator:
            # (T, hs) @ (hs, C)  with a sublane-aligned row slice of W_proj.
            acc = acc + jnp.dot(head.astype(jnp.bfloat16),
                                w_proj[h * hs:(h + 1) * hs, :],
                                preferred_element_type=jnp.float32)    # (T, C)

        o_ref[b] = (acc + bias).astype(o_ref.dtype)


def _pick_batch_block(B, T, max_rows=512):
    """Largest batch block that (a) divides B, (b) keeps >=2 grid steps so both
    TensorCores are fed on v7x, (c) keeps the fused MXU M-dimension <= max_rows."""
    cands = [bb for bb in range(1, B + 1)
             if B % bb == 0 and bb * T <= max_rows and B // bb >= 2]
    if cands:
        return max(cands)
    return 1  # B == 1 (or T too large): single batch element per step


@jax.jit
def multi_head_attention(x, wk, wq, wv, w_proj, b_proj):
    B, T, C = x.shape
    H, _, hs = wq.shape
    assert H * hs == C
    # PyTorch Head scales by C**-0.5 where C = x.shape[-1] (n_embd), per source.
    scale = C ** (-0.5)

    # Pack per-head (H, C, hs) weights -> (C, H*hs); fold scale into Wq;
    # pre-cast everything the MXU consumes to bf16 (one-time, outside kernel).
    def pack(w):
        return jnp.transpose(w, (1, 0, 2)).reshape(C, H * hs)
    w_qkv = jnp.concatenate([pack(wq) * scale, pack(wk), pack(wv)],
                            axis=-1).astype(jnp.bfloat16)              # (C, 3C)
    w_proj_bf = w_proj.astype(jnp.bfloat16)                            # (C, C)
    x_bf = x.astype(jnp.bfloat16)                                      # (B, T, C)
    b_proj2 = b_proj.reshape(1, C).astype(jnp.float32)                 # (1, C)

    Bb = _pick_batch_block(B, T)
    grid = (B // Bb,)

    return pl.pallas_call(
        functools.partial(_fused_mha_kernel, num_heads=H),
        out_shape=jax.ShapeDtypeStruct((B, T, C), x.dtype),
        grid=grid,
        in_specs=[
            pl.BlockSpec((Bb, T, C), lambda g: (g, 0, 0)),    # x batch block
            pl.BlockSpec((C, 3 * C), lambda g: (0, 0)),       # packed QKV weights
            pl.BlockSpec((C, C), lambda g: (0, 0)),           # projection weight
            pl.BlockSpec((1, C), lambda g: (0, 0)),           # projection bias
        ],
        out_specs=pl.BlockSpec((Bb, T, C), lambda g: (g, 0, 0)),
        compiler_params=pltpu.CompilerParams(
            dimension_semantics=("parallel",)),
    )(x_bf, w_qkv, w_proj_bf, b_proj2)


def _reference(x, wk, wq, wv, w_proj, b_proj):
    """Pure-JAX f32 reference mirroring the PyTorch module (eval mode)."""
    B, T, C = x.shape
    H, _, hs = wq.shape
    tril = jnp.tril(jnp.ones((T, T), bool))
    heads = []
    for h in range(H):
        k = x @ wk[h]
        q = x @ wq[h]
        v = x @ wv[h]
        wei = (q @ jnp.swapaxes(k, -2, -1)) * (C ** (-0.5))
        wei = jnp.where(tril, wei, -jnp.inf)
        wei = jax.nn.softmax(wei, axis=-1)
        heads.append(wei @ v)
    out = jnp.concatenate(heads, axis=-1)
    return out @ w_proj + b_proj


if __name__ == "__main__":
    # Small shapes consistent with the module (scaled-down n_embd / block_size).
    B, T = 2, 64
    n_embd = 128
    num_heads = 4
    head_size = n_embd // num_heads

    key = jax.random.PRNGKey(0)
    kx, kk, kq, kv, kw, kb = jax.random.split(key, 6)

    # PyTorch nn.Linear default init: U(-1/sqrt(fan_in), 1/sqrt(fan_in)).
    bound = 1.0 / (n_embd ** 0.5)
    x = jax.random.normal(kx, (B, T, n_embd), dtype=jnp.float32)
    # Per-head weights stored as (H, in_features, out_features) = W.T of torch.
    wk = jax.random.uniform(kk, (num_heads, n_embd, head_size), jnp.float32,
                            -bound, bound)
    wq = jax.random.uniform(kq, (num_heads, n_embd, head_size), jnp.float32,
                            -bound, bound)
    wv = jax.random.uniform(kv, (num_heads, n_embd, head_size), jnp.float32,
                            -bound, bound)
    # Projection stored as (in_features, out_features) = W.T of torch Linear.
    w_proj = jax.random.uniform(kw, (n_embd, n_embd), jnp.float32, -bound, bound)
    b_proj = jax.random.uniform(kb, (n_embd,), jnp.float32, -bound, bound)

    out = multi_head_attention(x, wk, wq, wv, w_proj, b_proj)
    out = jax.block_until_ready(out)
    assert out.shape == (B, T, n_embd)

    # Numerical check vs f32 reference (bf16 MXU + approx reciprocal -> loose tol).
    ref = jax.block_until_ready(_reference(x, wk, wq, wv, w_proj, b_proj))
    max_err = float(jnp.max(jnp.abs(out - ref)))
    assert max_err < 5e-2, f"max abs error {max_err}"
    print("KERNEL_OK")
</pallas_src>

<mosaic_0001>
module attributes {stable_mosaic.version = 11 : i64} {
  func.func @_fused_mha_kernel(%arg0: i32, %arg1: memref<1x64x128xbf16, #tpu.memory_space<vmem>>, %arg2: memref<128x384xbf16, #tpu.memory_space<vmem>>, %arg3: memref<128x128xbf16, #tpu.memory_space<vmem>>, %arg4: memref<1x128xf32, #tpu.memory_space<vmem>>, %arg5: memref<1x64x128xf32, #tpu.memory_space<vmem>>) attributes {dimension_semantics = [#tpu.dimension_semantics<parallel>], iteration_bounds = array<i64: 2>, scalar_prefetch = 0 : i64, scratch_operands = 0 : i64, tpu.core_type = #tpu.core_type<tc>, window_params = [{transform_indices = @transform_0, window_bounds = array<i64: 1, 64, 128>}, {pipeline_mode = #tpu.pipeline_mode<synchronous>, transform_indices = @transform_1, window_bounds = array<i64: 128, 384>}, {pipeline_mode = #tpu.pipeline_mode<synchronous>, transform_indices = @transform_2, window_bounds = array<i64: 128, 128>}, {pipeline_mode = #tpu.pipeline_mode<synchronous>, transform_indices = @transform_3, window_bounds = array<i64: 1, 128>}, {transform_indices = @transform_4, window_bounds = array<i64: 1, 64, 128>}]} {
    %c0 = arith.constant 0 : index
    %c0_0 = arith.constant 0 : index
    %c0_1 = arith.constant 0 : index
    %0 = vector.load %arg1[%c0, %c0_0, %c0_1] : memref<1x64x128xbf16, #tpu.memory_space<vmem>>, vector<1x64x128xbf16>
    %1 = vector.shape_cast %0 : vector<1x64x128xbf16> to vector<64x128xbf16>
    %c0_2 = arith.constant 0 : index
    %c0_3 = arith.constant 0 : index
    %2 = vector.load %arg2[%c0_2, %c0_3] : memref<128x384xbf16, #tpu.memory_space<vmem>>, vector<128x384xbf16>
    %cst = arith.constant dense<0.000000e+00> : vector<64x384xf32>
    %3 = tpu.matmul %1, %2, %cst {dimension_numbers = #tpu.dot_dimension_numbers<[1], [0], [0], [1], [0, 0, 1, 1], [], []>} : vector<64x128xbf16>, vector<128x384xbf16>, vector<64x384xf32> -> vector<64x384xf32>
    %4 = arith.truncf %3 : vector<64x384xf32> to vector<64x384xbf16>
    %5 = tpu.iota {dimensions = array<i32: 0>} : vector<64x64xi32>
    %6 = tpu.iota {dimensions = array<i32: 1>} : vector<64x64xi32>
    %7 = arith.cmpi sle, %6, %5 : vector<64x64xi32>
    %cst_4 = arith.constant 0.000000e+00 : f32
    %cst_5 = arith.constant -1.000000e+30 : f32
    %8 = vector.broadcast %cst_4 : f32 to vector<64x64xf32>
    %9 = vector.broadcast %cst_5 : f32 to vector<64x64xf32>
    %10 = arith.select %7, %8, %9 : vector<64x64xi1>, vector<64x64xf32>
    %c0_6 = arith.constant 0 : index
    %c0_7 = arith.constant 0 : index
    %11 = vector.load %arg3[%c0_6, %c0_7] : memref<128x128xbf16, #tpu.memory_space<vmem>>, vector<128x128xbf16>
    %c0_8 = arith.constant 0 : index
    %c0_9 = arith.constant 0 : index
    %12 = vector.load %arg4[%c0_8, %c0_9] : memref<1x128xf32, #tpu.memory_space<vmem>>, vector<1x128xf32>
    %13 = vector.extract_strided_slice %4 {offsets = [0, 0], sizes = [64, 128], strides = [1, 1]} : vector<64x384xbf16> to vector<64x128xbf16>
    %14 = vector.extract_strided_slice %4 {offsets = [0, 128], sizes = [64, 128], strides = [1, 1]} : vector<64x384xbf16> to vector<64x128xbf16>
    %15 = vector.extract_strided_slice %4 {offsets = [0, 256], sizes = [64, 128], strides = [1, 1]} : vector<64x384xbf16> to vector<64x128xbf16>
    %cst_10 = arith.constant 0.000000e+00 : f32
    %16 = vector.broadcast %cst_10 : f32 to vector<64x128xf32>
    %17 = vector.extract_strided_slice %13 {offsets = [0, 0], sizes = [64, 32], strides = [1, 1]} : vector<64x128xbf16> to vector<64x32xbf16>
    %18 = vector.extract_strided_slice %14 {offsets = [0, 0], sizes = [64, 32], strides = [1, 1]} : vector<64x128xbf16> to vector<64x32xbf16>
    %19 = vector.extract_strided_slice %15 {offsets = [0, 0], sizes = [64, 32], strides = [1, 1]} : vector<64x128xbf16> to vector<64x32xbf16>
    %cst_11 = arith.constant dense<0.000000e+00> : vector<64x64xf32>
    %20 = tpu.matmul %17, %18, %cst_11 {dimension_numbers = #tpu.dot_dimension_numbers<[1], [1], [0], [0], [0, 0, 1, 0], [], []>} : vector<64x32xbf16>, vector<64x32xbf16>, vector<64x64xf32> -> vector<64x64xf32>
    %21 = arith.addf %20, %10 : vector<64x64xf32>
    %cst_12 = arith.constant dense<0xFF800000> : vector<64xf32>
    %22 = vector.multi_reduction <maximumf>, %21, %cst_12 [1] : vector<64x64xf32> to vector<64xf32>
    %23 = vector.shape_cast %22 : vector<64xf32> to vector<64x1xf32>
    %24 = vector.broadcast %23 : vector<64x1xf32> to vector<64x64xf32>
    %25 = arith.subf %21, %24 : vector<64x64xf32>
    %26 = math.exp %25 : vector<64x64xf32>
    %cst_13 = arith.constant dense<0.000000e+00> : vector<64xf32>
    %27 = vector.multi_reduction <add>, %26, %cst_13 [1] : vector<64x64xf32> to vector<64xf32>
    %28 = vector.shape_cast %27 : vector<64xf32> to vector<64x1xf32>
    %29 = tpu.reciprocal %28 {approx = true} : vector<64x1xf32> -> vector<64x1xf32>
    %30 = vector.broadcast %29 : vector<64x1xf32> to vector<64x64xf32>
    %31 = arith.mulf %26, %30 : vector<64x64xf32>
    %32 = arith.truncf %31 : vector<64x64xf32> to vector<64x64xbf16>
    %cst_14 = arith.constant dense<0.000000e+00> : vector<64x32xf32>
    %33 = tpu.matmul %32, %19, %cst_14 {dimension_numbers = #tpu.dot_dimension_numbers<[1], [0], [0], [1], [0, 0, 1, 1], [], []>} : vector<64x64xbf16>, vector<64x32xbf16>, vector<64x32xf32> -> vector<64x32xf32>
    %34 = arith.truncf %33 : vector<64x32xf32> to vector<64x32xbf16>
    %35 = vector.extract_strided_slice %11 {offsets = [0, 0], sizes = [32, 128], strides = [1, 1]} : vector<128x128xbf16> to vector<32x128xbf16>
    %cst_15 = arith.constant dense<0.000000e+00> : vector<64x128xf32>
    %36 = tpu.matmul %34, %35, %cst_15 {dimension_numbers = #tpu.dot_dimension_numbers<[1], [0], [0], [1], [0, 0, 1, 1], [], []>} : vector<64x32xbf16>, vector<32x128xbf16>, vector<64x128xf32> -> vector<64x128xf32>
    %37 = arith.addf %16, %36 : vector<64x128xf32>
    %38 = vector.extract_strided_slice %13 {offsets = [0, 32], sizes = [64, 32], strides = [1, 1]} : vector<64x128xbf16> to vector<64x32xbf16>
    %39 = vector.extract_strided_slice %14 {offsets = [0, 32], sizes = [64, 32], strides = [1, 1]} : vector<64x128xbf16> to vector<64x32xbf16>
    %40 = vector.extract_strided_slice %15 {offsets = [0, 32], sizes = [64, 32], strides = [1, 1]} : vector<64x128xbf16> to vector<64x32xbf16>
    %cst_16 = arith.constant dense<0.000000e+00> : vector<64x64xf32>
    %41 = tpu.matmul %38, %39, %cst_16 {dimension_numbers = #tpu.dot_dimension_numbers<[1], [1], [0], [0], [0, 0, 1, 0], [], []>} : vector<64x32xbf16>, vector<64x32xbf16>, vector<64x64xf32> -> vector<64x64xf32>
    %42 = arith.addf %41, %10 : vector<64x64xf32>
    %cst_17 = arith.constant dense<0xFF800000> : vector<64xf32>
    %43 = vector.multi_reduction <maximumf>, %42, %cst_17 [1] : vector<64x64xf32> to vector<64xf32>
    %44 = vector.shape_cast %43 : vector<64xf32> to vector<64x1xf32>
    %45 = vector.broadcast %44 : vector<64x1xf32> to vector<64x64xf32>
    %46 = arith.subf %42, %45 : vector<64x64xf32>
    %47 = math.exp %46 : vector<64x64xf32>
    %cst_18 = arith.constant dense<0.000000e+00> : vector<64xf32>
    %48 = vector.multi_reduction <add>, %47, %cst_18 [1] : vector<64x64xf32> to vector<64xf32>
    %49 = vector.shape_cast %48 : vector<64xf32> to vector<64x1xf32>
    %50 = tpu.reciprocal %49 {approx = true} : vector<64x1xf32> -> vector<64x1xf32>
    %51 = vector.broadcast %50 : vector<64x1xf32> to vector<64x64xf32>
    %52 = arith.mulf %47, %51 : vector<64x64xf32>
    %53 = arith.truncf %52 : vector<64x64xf32> to vector<64x64xbf16>
    %cst_19 = arith.constant dense<0.000000e+00> : vector<64x32xf32>
    %54 = tpu.matmul %53, %40, %cst_19 {dimension_numbers = #tpu.dot_dimension_numbers<[1], [0], [0], [1], [0, 0, 1, 1], [], []>} : vector<64x64xbf16>, vector<64x32xbf16>, vector<64x32xf32> -> vector<64x32xf32>
    %55 = arith.truncf %54 : vector<64x32xf32> to vector<64x32xbf16>
    %56 = vector.extract_strided_slice %11 {offsets = [32, 0], sizes = [32, 128], strides = [1, 1]} : vector<128x128xbf16> to vector<32x128xbf16>
    %cst_20 = arith.constant dense<0.000000e+00> : vector<64x128xf32>
    %57 = tpu.matmul %55, %56, %cst_20 {dimension_numbers = #tpu.dot_dimension_numbers<[1], [0], [0], [1], [0, 0, 1, 1], [], []>} : vector<64x32xbf16>, vector<32x128xbf16>, vector<64x128xf32> -> vector<64x128xf32>
    %58 = arith.addf %37, %57 : vector<64x128xf32>
    %59 = vector.extract_strided_slice %13 {offsets = [0, 64], sizes = [64, 32], strides = [1, 1]} : vector<64x128xbf16> to vector<64x32xbf16>
    %60 = vector.extract_strided_slice %14 {offsets = [0, 64], sizes = [64, 32], strides = [1, 1]} : vector<64x128xbf16> to vector<64x32xbf16>
    %61 = vector.extract_strided_slice %15 {offsets = [0, 64], sizes = [64, 32], strides = [1, 1]} : vector<64x128xbf16> to vector<64x32xbf16>
    %cst_21 = arith.constant dense<0.000000e+00> : vector<64x64xf32>
    %62 = tpu.matmul %59, %60, %cst_21 {dimension_numbers = #tpu.dot_dimension_numbers<[1], [1], [0], [0], [0, 0, 1, 0], [], []>} : vector<64x32xbf16>, vector<64x32xbf16>, vector<64x64xf32> -> vector<64x64xf32>
    %63 = arith.addf %62, %10 : vector<64x64xf32>
    %cst_22 = arith.constant dense<0xFF800000> : vector<64xf32>
    %64 = vector.multi_reduction <maximumf>, %63, %cst_22 [1] : vector<64x64xf32> to vector<64xf32>
    %65 = vector.shape_cast %64 : vector<64xf32> to vector<64x1xf32>
    %66 = vector.broadcast %65 : vector<64x1xf32> to vector<64x64xf32>
    %67 = arith.subf %63, %66 : vector<64x64xf32>
    %68 = math.exp %67 : vector<64x64xf32>
    %cst_23 = arith.constant dense<0.000000e+00> : vector<64xf32>
    %69 = vector.multi_reduction <add>, %68, %cst_23 [1] : vector<64x64xf32> to vector<64xf32>
    %70 = vector.shape_cast %69 : vector<64xf32> to vector<64x1xf32>
    %71 = tpu.reciprocal %70 {approx = true} : vector<64x1xf32> -> vector<64x1xf32>
    %72 = vector.broadcast %71 : vector<64x1xf32> to vector<64x64xf32>
    %73 = arith.mulf %68, %72 : vector<64x64xf32>
    %74 = arith.truncf %73 : vector<64x64xf32> to vector<64x64xbf16>
    %cst_24 = arith.constant dense<0.000000e+00> : vector<64x32xf32>
    %75 = tpu.matmul %74, %61, %cst_24 {dimension_numbers = #tpu.dot_dimension_numbers<[1], [0], [0], [1], [0, 0, 1, 1], [], []>} : vector<64x64xbf16>, vector<64x32xbf16>, vector<64x32xf32> -> vector<64x32xf32>
    %76 = arith.truncf %75 : vector<64x32xf32> to vector<64x32xbf16>
    %77 = vector.extract_strided_slice %11 {offsets = [64, 0], sizes = [32, 128], strides = [1, 1]} : vector<128x128xbf16> to vector<32x128xbf16>
    %cst_25 = arith.constant dense<0.000000e+00> : vector<64x128xf32>
    %78 = tpu.matmul %76, %77, %cst_25 {dimension_numbers = #tpu.dot_dimension_numbers<[1], [0], [0], [1], [0, 0, 1, 1], [], []>} : vector<64x32xbf16>, vector<32x128xbf16>, vector<64x128xf32> -> vector<64x128xf32>
    %79 = arith.addf %58, %78 : vector<64x128xf32>
    %80 = vector.extract_strided_slice %13 {offsets = [0, 96], sizes = [64, 32], strides = [1, 1]} : vector<64x128xbf16> to vector<64x32xbf16>
    %81 = vector.extract_strided_slice %14 {offsets = [0, 96], sizes = [64, 32], strides = [1, 1]} : vector<64x128xbf16> to vector<64x32xbf16>
    %82 = vector.extract_strided_slice %15 {offsets = [0, 96], sizes = [64, 32], strides = [1, 1]} : vector<64x128xbf16> to vector<64x32xbf16>
    %cst_26 = arith.constant dense<0.000000e+00> : vector<64x64xf32>
    %83 = tpu.matmul %80, %81, %cst_26 {dimension_numbers = #tpu.dot_dimension_numbers<[1], [1], [0], [0], [0, 0, 1, 0], [], []>} : vector<64x32xbf16>, vector<64x32xbf16>, vector<64x64xf32> -> vector<64x64xf32>
    %84 = arith.addf %83, %10 : vector<64x64xf32>
    %cst_27 = arith.constant dense<0xFF800000> : vector<64xf32>
    %85 = vector.multi_reduction <maximumf>, %84, %cst_27 [1] : vector<64x64xf32> to vector<64xf32>
    %86 = vector.shape_cast %85 : vector<64xf32> to vector<64x1xf32>
    %87 = vector.broadcast %86 : vector<64x1xf32> to vector<64x64xf32>
    %88 = arith.subf %84, %87 : vector<64x64xf32>
    %89 = math.exp %88 : vector<64x64xf32>
    %cst_28 = arith.constant dense<0.000000e+00> : vector<64xf32>
    %90 = vector.multi_reduction <add>, %89, %cst_28 [1] : vector<64x64xf32> to vector<64xf32>
    %91 = vector.shape_cast %90 : vector<64xf32> to vector<64x1xf32>
    %92 = tpu.reciprocal %91 {approx = true} : vector<64x1xf32> -> vector<64x1xf32>
    %93 = vector.broadcast %92 : vector<64x1xf32> to vector<64x64xf32>
    %94 = arith.mulf %89, %93 : vector<64x64xf32>
    %95 = arith.truncf %94 : vector<64x64xf32> to vector<64x64xbf16>
    %cst_29 = arith.constant dense<0.000000e+00> : vector<64x32xf32>
    %96 = tpu.matmul %95, %82, %cst_29 {dimension_numbers = #tpu.dot_dimension_numbers<[1], [0], [0], [1], [0, 0, 1, 1], [], []>} : vector<64x64xbf16>, vector<64x32xbf16>, vector<64x32xf32> -> vector<64x32xf32>
    %97 = arith.truncf %96 : vector<64x32xf32> to vector<64x32xbf16>
    %98 = vector.extract_strided_slice %11 {offsets = [96, 0], sizes = [32, 128], strides = [1, 1]} : vector<128x128xbf16> to vector<32x128xbf16>
    %cst_30 = arith.constant dense<0.000000e+00> : vector<64x128xf32>
    %99 = tpu.matmul %97, %98, %cst_30 {dimension_numbers = #tpu.dot_dimension_numbers<[1], [0], [0], [1], [0, 0, 1, 1], [], []>} : vector<64x32xbf16>, vector<32x128xbf16>, vector<64x128xf32> -> vector<64x128xf32>
    %100 = arith.addf %79, %99 : vector<64x128xf32>
    %101 = vector.broadcast %12 : vector<1x128xf32> to vector<64x128xf32>
    %102 = arith.addf %100, %101 : vector<64x128xf32>
    %c0_31 = arith.constant 0 : index
    %c0_32 = arith.constant 0 : index
    %c0_33 = arith.constant 0 : index
    %103 = vector.load %arg5[%c0_31, %c0_32, %c0_33] : memref<1x64x128xf32, #tpu.memory_space<vmem>>, vector<1x64x128xf32>
    %104 = vector.shape_cast %103 : vector<1x64x128xf32> to vector<64x128xf32>
    %105 = vector.shape_cast %102 : vector<64x128xf32> to vector<1x64x128xf32>
    tpu.vector_store %arg5[%c0_31, %c0_32, %c0_33], %105 {strides = array<i32>} : memref<1x64x128xf32, #tpu.memory_space<vmem>>, vector<1x64x128xf32>,
    return
  }
  func.func @transform_0(%arg0: i32) -> (i32, i32, i32) {
    %c0_i32 = arith.constant 0 : i32
    %c0_i32_0 = arith.constant 0 : i32
    %c0_i32_1 = arith.constant 0 : i32
    return %arg0, %c0_i32, %c0_i32_0 : i32, i32, i32
  }
  func.func @transform_1(%arg0: i32) -> (i32, i32) {
    %c0_i32 = arith.constant 0 : i32
    %c0_i32_0 = arith.constant 0 : i32
    %c0_i32_1 = arith.constant 0 : i32
    return %c0_i32, %c0_i32_0 : i32, i32
  }
  func.func @transform_2(%arg0: i32) -> (i32, i32) {
    %c0_i32 = arith.constant 0 : i32
    %c0_i32_0 = arith.constant 0 : i32
    %c0_i32_1 = arith.constant 0 : i32
    return %c0_i32, %c0_i32_0 : i32, i32
  }
  func.func @transform_3(%arg0: i32) -> (i32, i32) {
    %c0_i32 = arith.constant 0 : i32
    %c0_i32_0 = arith.constant 0 : i32
    %c0_i32_1 = arith.constant 0 : i32
    return %c0_i32, %c0_i32_0 : i32, i32
  }
  func.func @transform_4(%arg0: i32) -> (i32, i32, i32) {
    %c0_i32 = arith.constant 0 : i32
    %c0_i32_0 = arith.constant 0 : i32
    %c0_i32_1 = arith.constant 0 : i32
    return %arg0, %c0_i32, %c0_i32_0 : i32, i32, i32
  }
}

</mosaic_0001>

<llo_original>
// kernel: multi_head_attention.1
$region0: #{multi_head_attention.1}
  #allocation0 [shape = 'u32[]', space=smem, size = 0x4, offset = 0x4, fixed_abs, tag = 'smem constant byte address 0x4 - core index']
  #allocation1 [shape = 'u32[144,128]{1,0:T(1,128)}', space=vmem, size = 0x12000, scoped, tag = 'internal scratch']
  %s0 = inlined_call_operand.vmem [shape: bf16[2,64,128], index: 0, kind: input, shape index: {}]
  %s1 = inlined_call_operand.vmem [shape: bf16[128,384], index: 1, kind: input, shape index: {}]
  %s2 = inlined_call_operand.vmem [shape: bf16[128,128], index: 2, kind: input, shape index: {}]
  %s3 = inlined_call_operand.vmem [shape: f32[1,128], index: 3, kind: input, shape index: {}]
  %s4 = inlined_call_operand.hbm [shape: f32[2,64,128], index: 4, kind: output, shape index: {}]
  %s5 = sld [smem:[#allocation0]]
  $region49: #{multi_head_attention.1} parent=0
    _
  %s7 = ssub.s32 1, %s5
  %s8 = scalar_select 0, %s7, %s5
  $region1: #{multi_head_attention.1} parent=0
    #allocation2 [shape = 'u8[65536]{0}', space=vmem, size = 0x10000, scoped, tag = 'output window, operand 0']
    #allocation3 [shape = 's32[2]{0}', space=sflag, size = 0x8, scoped, tag = 'scoped memory for multi_head_attention.1']
    %9 = vsyncpa [#allocation3], 0
    %s10 = scalar_lea.sflag [#allocation3], 1
    %11 = vsyncpa %s10, 0
    loop: start=0, step=1, limit=4
    $region2: #{multi_head_attention.1} parent=1 // loop_pre_header
      _
    $region3: #{multi_head_attention.1} parent=1 // loop_header
      %s13 = sphi 0, %s17
      %p14 = scmp.ge.s32.totalorder %s13, 4
      %s23 = sphi 0, %s25
      %s26 = sphi 0, %s23
      %s27 = sphi 0, %s26
      %s43 = sphi 0, %s27
      %s47 = sphi 0, %s47
      %s49 = sphi 0, %s47
      %s50 = sphi 0, %s49
      %s64 = sphi 0, %s50
      %s68 = sphi 0, %s68
      %s70 = sphi 0, %s68
      %s71 = sphi 0, %s70
      %s85 = sphi 0, %s71
      %s89 = sphi 0, %s89
      %s91 = sphi 0, %s89
      %s92 = sphi 0, %s91
      %s106 = sphi 0, %s92
      %s112 = sphi 0, %s114
      %s115 = sphi 0, %s112
      %s116 = sphi 0, %s115
      %s132 = sphi 0, %s116
    $region4: #{multi_head_attention.1} parent=1 // loop_header_branch
      %16 = sbr.rel (%p14) target = $region8
    $region5: #{multi_head_attention.1} parent=1 // loop_body
      %s18 = ssub.s32 %s13, 1
      %s19 = ssub.s32 %s13, 2
      %s20 = sadd.s32 %s13, 1
      %s21 = ssub.s32 %s13, %s20
      %p22 = scmp.eq.s32.totalorder %s21, 0
      %s24 = sadd.s32 %s23, 1
      %s25 = scalar_select %p22, %s23, %s24
      %p28 = pneg %p22
      %p29 = scmp.eq.s32.totalorder %s13, 1
      %p30 = por %p28, %p29
      %p31 = scmp.ne.s32.totalorder %s23, %s26
      %p32 = scmp.eq.s32.totalorder %s13, 0
      %p33 = por %p31, %p32
      %p34 = scmp.ne.s32.totalorder %s23, %s26
      %p35 = scmp.eq.s32.totalorder %s18, 1
      %p36 = por %p34, %p35
      %p37 = scmp.ne.s32.totalorder %s26, %s27
      %p38 = scmp.eq.s32.totalorder %s18, 0
      %p39 = por %p37, %p38
      %p40 = scmp.ne.s32.totalorder %s26, %s27
      %p41 = scmp.eq.s32.totalorder %s19, 1
      %p42 = por %p40, %p41
      %p44 = scmp.ne.s32.totalorder %s27, %s43
      %p45 = scmp.eq.s32.totalorder %s19, 0
      %p46 = por %p44, %p45
      %s48 = sadd.s32 %s47, 1
      %p51 = scmp.eq.s32.totalorder %s13, 1
      %p52 = scmp.ne.s32.totalorder %s47, %s49
      %p53 = scmp.eq.s32.totalorder %s13, 0
      %p54 = por %p52, %p53
      %p55 = scmp.ne.s32.totalorder %s47, %s49
      %p56 = scmp.eq.s32.totalorder %s18, 1
      %p57 = por %p55, %p56
      %p58 = scmp.ne.s32.totalorder %s49, %s50
      %p59 = scmp.eq.s32.totalorder %s18, 0
      %p60 = por %p58, %p59
      %p61 = scmp.ne.s32.totalorder %s49, %s50
      %p62 = scmp.eq.s32.totalorder %s19, 1
      %p63 = por %p61, %p62
      %p65 = scmp.ne.s32.totalorder %s50, %s64
      %p66 = scmp.eq.s32.totalorder %s19, 0
      %p67 = por %p65, %p66
      %s69 = sadd.s32 %s68, 1
      %p72 = scmp.eq.s32.totalorder %s13, 1
      %p73 = scmp.ne.s32.totalorder %s68, %s70
      %p74 = scmp.eq.s32.totalorder %s13, 0
      %p75 = por %p73, %p74
      %p76 = scmp.ne.s32.totalorder %s68, %s70
      %p77 = scmp.eq.s32.totalorder %s18, 1
      %p78 = por %p76, %p77
      %p79 = scmp.ne.s32.totalorder %s70, %s71
      %p80 = scmp.eq.s32.totalorder %s18, 0
      %p81 = por %p79, %p80
      %p82 = scmp.ne.s32.totalorder %s70, %s71
      %p83 = scmp.eq.s32.totalorder %s19, 1
      %p84 = por %p82, %p83
      %p86 = scmp.ne.s32.totalorder %s71, %s85
      %p87 = scmp.eq.s32.totalorder %s19, 0
      %p88 = por %p86, %p87
      %s90 = sadd.s32 %s89, 1
      %p93 = scmp.eq.s32.totalorder %s13, 1
      %p94 = scmp.ne.s32.totalorder %s89, %s91
      %p95 = scmp.eq.s32.totalorder %s13, 0
      %p96 = por %p94, %p95
      %p97 = scmp.ne.s32.totalorder %s89, %s91
      %p98 = scmp.eq.s32.totalorder %s18, 1
      %p99 = por %p97, %p98
      %p100 = scmp.ne.s32.totalorder %s91, %s92
      %p101 = scmp.eq.s32.totalorder %s18, 0
      %p102 = por %p100, %p101
      %p103 = scmp.ne.s32.totalorder %s91, %s92
      %p104 = scmp.eq.s32.totalorder %s19, 1
      %p105 = por %p103, %p104
      %p107 = scmp.ne.s32.totalorder %s92, %s106
      %p108 = scmp.eq.s32.totalorder %s19, 0
      %p109 = por %p107, %p108
      %s110 = ssub.s32 %s13, %s20
      %p111 = scmp.eq.s32.totalorder %s110, 0
      %s113 = sadd.s32 %s112, 1
      %s114 = scalar_select %p111, %s112, %s113
      %p117 = pneg %p111
      %p118 = scmp.eq.s32.totalorder %s13, 1
      %p119 = por %p117, %p118
      %p120 = scmp.ne.s32.totalorder %s112, %s115
      %p121 = scmp.eq.s32.totalorder %s13, 0
      %p122 = por %p120, %p121
      %p123 = scmp.ne.s32.totalorder %s112, %s115
      %p124 = scmp.eq.s32.totalorder %s18, 1
      %p125 = por %p123, %p124
      %p126 = scmp.ne.s32.totalorder %s115, %s116
      %p127 = scmp.eq.s32.totalorder %s18, 0
      %p128 = por %p126, %p127
      %p129 = scmp.ne.s32.totalorder %s115, %s116
      %p130 = scmp.eq.s32.totalorder %s19, 1
      %p131 = por %p129, %p130
      %p133 = scmp.ne.s32.totalorder %s116, %s132
      %p134 = scmp.eq.s32.totalorder %s19, 0
      %p135 = por %p133, %p134
      %p136 = scmp.le.s32.totalorder 1, %s13
      %p137 = scmp.lt.s32.totalorder %s13, 3
      %p138 = pnand %p136, %p137
      %p139 = pneg %p138
      // Predicated region
      $region9: #{multi_head_attention.1} parent=5 // pred_check
        _
      $region10: #{multi_head_attention.1} parent=5 // pred_check_branch
        %141 = sbr.rel (%p138) target = $region12
      $region11: #{multi_head_attention.1} parent=5 // pred_region
        %s142 = ssub.s32 %s13, 1
        // Predicated region
        $region13: #{multi_head_attention.1} parent=11 // pred_check
          %p143 = pneg %p60
        $region14: #{multi_head_attention.1} parent=11 // pred_check_branch
          %145 = sbr.rel (%p143) target = $region16
        $region15: #{multi_head_attention.1} parent=11 // pred_region
          _
        $region16: #{multi_head_attention.1} parent=11 // pred_fallthru
          _
        // Predicated region
        $region17: #{multi_head_attention.1} parent=11 // pred_check
          %p146 = pneg %p81
        $region18: #{multi_head_attention.1} parent=11 // pred_check_branch
          %148 = sbr.rel (%p146) target = $region20
        $region19: #{multi_head_attention.1} parent=11 // pred_region
          _
        $region20: #{multi_head_attention.1} parent=11 // pred_fallthru
          _
        // Predicated region
        $region21: #{multi_head_attention.1} parent=11 // pred_check
          %p149 = pneg %p102
        $region22: #{multi_head_attention.1} parent=11 // pred_check_branch
          %151 = sbr.rel (%p149) target = $region24
        $region23: #{multi_head_attention.1} parent=11 // pred_region
          _
        $region24: #{multi_head_attention.1} parent=11 // pred_fallthru
          _
      $region12: #{multi_head_attention.1} parent=5 // pred_fallthru
        _
      %p152 = scmp.lt.s32.totalorder %s13, 2
      // Predicated region
      $region25: #{multi_head_attention.1} parent=5 // pred_check
        %p153 = pneg %p152
      $region26: #{multi_head_attention.1} parent=5 // pred_check_branch
        %155 = sbr.rel (%p153) target = $region28
      $region27: #{multi_head_attention.1} parent=5 // pred_region
        // Predicated region
        $region29: #{multi_head_attention.1} parent=27 // pred_check
          %p156 = pneg %p33
        $region30: #{multi_head_attention.1} parent=27 // pred_check_branch
          %158 = sbr.rel (%p156) target = $region32
        $region31: #{multi_head_attention.1} parent=27 // pred_region
          %p159 = scmp.lt.s32.totalorder %s13, 1
          %s160 = scalar_select %p159, %s13, 1
          %s161 = smul.addr %s160, 8
          %s162 = smul.addr %s161, 4
          %s163 = scalar_lea.vmem %s0, %s162
        $region32: #{multi_head_attention.1} parent=27 // pred_fallthru
          _
      $region28: #{multi_head_attention.1} parent=5 // pred_fallthru
        _
      %p164 = scmp.le.s32.totalorder 1, %s13
      %p165 = scmp.lt.s32.totalorder %s13, 3
      %p166 = pnand %p164, %p165
      %p167 = pneg %p166
      // Predicated region
      $region33: #{multi_head_attention.1} parent=5 // pred_check
        _
      $region34: #{multi_head_attention.1} parent=5 // pred_check_branch
        %169 = sbr.rel (%p166) target = $region36
      $region35: #{multi_head_attention.1} parent=5 // pred_region
        %s170 = ssub.s32 %s13, 1
        %p171 = scmp.lt.s32.totalorder %s18, 1
        %s172 = scalar_select %p171, %s18, 1
        %s173 = smul.addr %s172, 8
        %s174 = smul.addr %s173, 4
        %s175 = scalar_lea.vmem %s0, %s174
        %p176 = pneg %p39
        %p177 = pneg %p36
        %p178 = pneg %p60
        %p179 = pneg %p57
        %p180 = pneg %p81
        %p181 = pneg %p78
        %p182 = pneg %p102
        %p183 = pneg %p99
        %p184 = pneg %p128
        %p185 = pneg %p125
        %s186 = sand.u32 %s115, 1
        %s187 = scalar_lea.sflag [#allocation3], %s186
        %s188 = sand.u32 %s115, 1
        %s189 = smul.addr %s188, 64
        %s190 = scalar_lea.vmem [#allocation2], %s189
        %p191 = scmp.lt.s32.totalorder %s18, 1
        %s192 = scalar_select %p191, %s18, 1
        %s193 = smul.addr %s192, 8
        %s194 = smul.addr %s193, 4
        %s195 = scalar_lea.vmem %s0, %s194
        %v197 = vld [vmem:[%s195] sm:$0xf]
        %v198 = vld [vmem:[%s195 + $0x4] sm:$0xf]
        %v199 = vld [vmem:[%s195 + $0x8] sm:$0xf]
        %v200 = vld [vmem:[%s195 + $0xc] sm:$0xf]
        %v201 = vld [vmem:[%s195 + $0x10] sm:$0xf]
        %v202 = vld [vmem:[%s195 + $0x14] sm:$0xf]
        %v203 = vld [vmem:[%s195 + $0x18] sm:$0xf]
        %v204 = vld [vmem:[%s195 + $0x1c] sm:$0xf]
        %v205 = vld [vmem:[%s1] sm:$0xff]
        %v206 = vld [vmem:[%s1 + $0x8] sm:$0xf]
        %v207 = vld [vmem:[%s1 + $0xc] sm:$0xff]
        %v208 = vld [vmem:[%s1 + $0x14] sm:$0xf]
        %v209 = vld [vmem:[%s1 + $0x18] sm:$0xff]
        %v210 = vld [vmem:[%s1 + $0x20] sm:$0xf]
        %v211 = vld [vmem:[%s1 + $0x24] sm:$0xff]
        %v212 = vld [vmem:[%s1 + $0x2c] sm:$0xf]
        %v213 = vld [vmem:[%s1 + $0x30] sm:$0xff]
        %v214 = vld [vmem:[%s1 + $0x38] sm:$0xf]
        %v215 = vld [vmem:[%s1 + $0x3c] sm:$0xff]
        %v216 = vld [vmem:[%s1 + $0x44] sm:$0xf]
        %v217 = vld [vmem:[%s1 + $0x48] sm:$0xff]
        %v218 = vld [vmem:[%s1 + $0x50] sm:$0xf]
        %v219 = vld [vmem:[%s1 + $0x54] sm:$0xff]
        %v220 = vld [vmem:[%s1 + $0x5c] sm:$0xf]
        %v221 = vld [vmem:[%s1 + $0x60] sm:$0xff]
        %v222 = vld [vmem:[%s1 + $0x68] sm:$0xf]
        %v223 = vld [vmem:[%s1 + $0x6c] sm:$0xff]
        %v224 = vld [vmem:[%s1 + $0x74] sm:$0xf]
        %v225 = vld [vmem:[%s1 + $0x78] sm:$0xff]
        %v226 = vld [vmem:[%s1 + $0x80] sm:$0xf]
        %v227 = vld [vmem:[%s1 + $0x84] sm:$0xff]
        %v228 = vld [vmem:[%s1 + $0x8c] sm:$0xf]
        %v229 = vld [vmem:[%s1 + $0x90] sm:$0xff]
        %v230 = vld [vmem:[%s1 + $0x98] sm:$0xf]
        %v231 = vld [vmem:[%s1 + $0x9c] sm:$0xff]
        %v232 = vld [vmem:[%s1 + $0xa4] sm:$0xf]
        %v233 = vld [vmem:[%s1 + $0xa8] sm:$0xff]
        %v234 = vld [vmem:[%s1 + $0xb0] sm:$0xf]
        %v235 = vld [vmem:[%s1 + $0xb4] sm:$0xff]
        %v236 = vld [vmem:[%s1 + $0xbc] sm:$0xf]
        %v245 = vunpack.c.l.b16 %v197
        %v246 = vunpack.c.l.b16 %v198
        %v247 = vunpack.c.l.b16 %v199
        %v248 = vunpack.c.l.b16 %v200
        %v249 = vunpack.c.l.b16 %v201
        %v250 = vunpack.c.l.b16 %v202
        %v251 = vunpack.c.l.b16 %v203
        %v252 = vunpack.c.l.b16 %v204
        %v253 = vpack.c.b16 %v246, %v245
        %v254 = vpack.c.b16 %v248, %v247
        %v255 = vpack.c.b16 %v250, %v249
        %v256 = vpack.c.b16 %v252, %v251
        %v293 = vunpack.c.l.b16 %v205
        %v294 = vunpack.c.h.b16 %v205
        %v295 = vunpack.c.l.b16 %v206
        %v296 = vunpack.c.l.b16 %v207
        %v297 = vunpack.c.h.b16 %v207
        %v298 = vunpack.c.l.b16 %v208
        %v299 = vunpack.c.l.b16 %v209
        %v300 = vunpack.c.h.b16 %v209
        %v301 = vunpack.c.l.b16 %v210
        %v302 = vunpack.c.l.b16 %v211
        %v303 = vunpack.c.h.b16 %v211
        %v304 = vunpack.c.l.b16 %v212
        %v305 = vunpack.c.l.b16 %v213
        %v306 = vunpack.c.h.b16 %v213
        %v307 = vunpack.c.l.b16 %v214
        %v308 = vunpack.c.l.b16 %v215
        %v309 = vunpack.c.h.b16 %v215
        %v310 = vunpack.c.l.b16 %v216
        %v311 = vunpack.c.l.b16 %v217
        %v312 = vunpack.c.h.b16 %v217
        %v313 = vunpack.c.l.b16 %v218
        %v314 = vunpack.c.l.b16 %v219
        %v315 = vunpack.c.h.b16 %v219
        %v316 = vunpack.c.l.b16 %v220
        %v317 = vunpack.c.l.b16 %v221
        %v318 = vunpack.c.h.b16 %v221
        %v319 = vunpack.c.l.b16 %v222
        %v320 = vunpack.c.l.b16 %v223
        %v321 = vunpack.c.h.b16 %v223
        %v322 = vunpack.c.l.b16 %v224
        %v323 = vunpack.c.l.b16 %v225
        %v324 = vunpack.c.h.b16 %v225
        %v325 = vunpack.c.l.b16 %v226
        %v326 = vunpack.c.l.b16 %v227
        %v327 = vunpack.c.h.b16 %v227
        %v328 = vunpack.c.l.b16 %v228
        %v329 = vunpack.c.l.b16 %v229
        %v330 = vunpack.c.h.b16 %v229
        %v331 = vunpack.c.l.b16 %v230
        %v332 = vunpack.c.l.b16 %v231
        %v333 = vunpack.c.h.b16 %v231
        %v334 = vunpack.c.l.b16 %v232
        %v335 = vunpack.c.l.b16 %v233
        %v336 = vunpack.c.h.b16 %v233
        %v337 = vunpack.c.l.b16 %v234
        %v338 = vunpack.c.l.b16 %v235
        %v339 = vunpack.c.h.b16 %v235
        %v340 = vunpack.c.l.b16 %v236
        %v341 = vpack.c.b16 %v296, %v293
        %v342 = vpack.c.b16 %v297, %v294
        %v343 = vpack.c.b16 %v298, %v295
        %v344 = vpack.c.b16 %v302, %v299
        %v345 = vpack.c.b16 %v303, %v300
        %v346 = vpack.c.b16 %v304, %v301
        %v347 = vpack.c.b16 %v308, %v305
        %v348 = vpack.c.b16 %v309, %v306
        %v349 = vpack.c.b16 %v310, %v307
        %v350 = vpack.c.b16 %v314, %v311
        %v351 = vpack.c.b16 %v315, %v312
        %v352 = vpack.c.b16 %v316, %v313
        %v353 = vpack.c.b16 %v320, %v317
        %v354 = vpack.c.b16 %v321, %v318
        %v355 = vpack.c.b16 %v322, %v319
        %v356 = vpack.c.b16 %v326, %v323
        %v357 = vpack.c.b16 %v327, %v324
        %v358 = vpack.c.b16 %v328, %v325
        %v359 = vpack.c.b16 %v332, %v329
        %v360 = vpack.c.b16 %v333, %v330
        %v361 = vpack.c.b16 %v334, %v331
        %v362 = vpack.c.b16 %v338, %v335
        %v363 = vpack.c.b16 %v339, %v336
        %v364 = vpack.c.b16 %v340, %v337
        %389 = vmatprep.subr.bf16.mxu0 %v342
        %390 = vmatpush1.bf16.msra.mxu0 %v341
        %391 = vmatprep.subr.bf16.mxu0 %v345
        %392 = vmatpush1.bf16.msra.mxu0 %v344
        %393 = vmatprep.subr.bf16.mxu0 %v348
        %394 = vmatpush1.bf16.msra.mxu0 %v347
        %395 = vmatprep.subr.bf16.mxu0 %v351
        %396 = vmatpush1.bf16.msra.mxu0 %v350
        %397 = vmatprep.subr.bf16.mxu0 %v354
        %398 = vmatpush1.bf16.msra.mxu0 %v353
        %399 = vmatprep.subr.bf16.mxu0 %v357
        %400 = vmatpush1.bf16.msra.mxu0 %v356
        %401 = vmatprep.subr.bf16.mxu0 %v360
        %402 = vmatpush1.bf16.msra.mxu0 %v359
        %403 = vmatprep.subr.bf16.mxu0 %v363
        %404 = vmatpush1.bf16.msra.mxu0 %v362
        %405 = vmatprep.subr.bf16.mxu0 0
        %406 = vmatpush1.bf16.msra.mxu0 0
        %407 = vmatprep.subr.bf16.mxu0 0
        %408 = vmatpush1.bf16.msra.mxu0 0
        %409 = vmatprep.subr.bf16.mxu0 0
        %410 = vmatpush1.bf16.msra.mxu0 0
        %411 = vmatprep.subr.bf16.mxu0 0
        %412 = vmatpush1.bf16.msra.mxu0 0
        %413 = vmatprep.subr.bf16.mxu0 0
        %414 = vmatpush1.bf16.msra.mxu0 0
        %415 = vmatprep.subr.bf16.mxu0 0
        %416 = vmatpush1.bf16.msra.mxu0 0
        %417 = vmatprep.subr.bf16.mxu0 0
        %418 = vmatpush1.bf16.msra.mxu0 0
        %419 = vmatprep.subr.bf16.mxu0 0
        %420 = vmatpush1.bf16.msra.mxu0 0
        %421 = vmatprep.mubr.bf16.mxu0 0
        %422 = vmatmul.mubr.bf16.gmra.mrb[0].mxu0 %v253
        %v423 = vpop.f32.mrb[0].mxu0
        %v424 = vadd.f32 0.0, %v423
        %v425 = vpop.f32.mrb[0].mxu0
        %v426 = vadd.f32 0.0, %v425
        %v427 = vpop.f32.mrb[0].mxu0
        %v428 = vadd.f32 0.0, %v427
        %v429 = vpop.f32.mrb[0].mxu0
        %v430 = vadd.f32 0.0, %v429
        %431 = vmatprep.mubr.bf16.mxu0 0
        %432 = vmatmul.mubr.bf16.gmra.mrb[0].mxu0 %v254
        %v433 = vpop.f32.mrb[0].mxu0
        %v434 = vadd.f32 0.0, %v433
        %v435 = vpop.f32.mrb[0].mxu0
        %v436 = vadd.f32 0.0, %v435
        %v437 = vpop.f32.mrb[0].mxu0
        %v438 = vadd.f32 0.0, %v437
        %v439 = vpop.f32.mrb[0].mxu0
        %v440 = vadd.f32 0.0, %v439
        %441 = vmatprep.mubr.bf16.mxu0 0
        %442 = vmatmul.mubr.bf16.gmra.mrb[0].mxu0 %v255
        %v443 = vpop.f32.mrb[0].mxu0
        %v444 = vadd.f32 0.0, %v443
        %v445 = vpop.f32.mrb[0].mxu0
        %v446 = vadd.f32 0.0, %v445
        %v447 = vpop.f32.mrb[0].mxu0
        %v448 = vadd.f32 0.0, %v447
        %v449 = vpop.f32.mrb[0].mxu0
        %v450 = vadd.f32 0.0, %v449
        %451 = vmatprep.mubr.bf16.mxu0 0
        %452 = vmatmul.mubr.bf16.gmra.mrb[0].mxu0 %v256
        %v453 = vpop.f32.mrb[0].mxu0
        %v454 = vadd.f32 0.0, %v453
        %v455 = vpop.f32.mrb[0].mxu0
        %v456 = vadd.f32 0.0, %v455
        %v457 = vpop.f32.mrb[0].mxu0
        %v458 = vadd.f32 0.0, %v457
        %v459 = vpop.f32.mrb[0].mxu0
        %v460 = vadd.f32 0.0, %v459
        %461 = vdwg.mxu0
        %462 = vmatprep.subr.bf16.mxu0 0
        %463 = vmatpush1.bf16.msra.mxu0 %v343
        %464 = vmatprep.subr.bf16.mxu0 0
        %465 = vmatpush1.bf16.msra.mxu0 %v346
        %466 = vmatprep.subr.bf16.mxu0 0
        %467 = vmatpush1.bf16.msra.mxu0 %v349
        %468 = vmatprep.subr.bf16.mxu0 0
        %469 = vmatpush1.bf16.msra.mxu0 %v352
        %470 = vmatprep.subr.bf16.mxu0 0
        %471 = vmatpush1.bf16.msra.mxu0 %v355
        %472 = vmatprep.subr.bf16.mxu0 0
        %473 = vmatpush1.bf16.msra.mxu0 %v358
        %474 = vmatprep.subr.bf16.mxu0 0
        %475 = vmatpush1.bf16.msra.mxu0 %v361
        %476 = vmatprep.subr.bf16.mxu0 0
        %477 = vmatpush1.bf16.msra.mxu0 %v364
        %478 = vmatprep.subr.bf16.mxu0 0
        %479 = vmatpush1.bf16.msra.mxu0 0
        %480 = vmatprep.subr.bf16.mxu0 0
        %481 = vmatpush1.bf16.msra.mxu0 0
        %482 = vmatprep.subr.bf16.mxu0 0
        %483 = vmatpush1.bf16.msra.mxu0 0
        %484 = vmatprep.subr.bf16.mxu0 0
        %485 = vmatpush1.bf16.msra.mxu0 0
        %486 = vmatprep.subr.bf16.mxu0 0
        %487 = vmatpush1.bf16.msra.mxu0 0
        %488 = vmatprep.subr.bf16.mxu0 0
        %489 = vmatpush1.bf16.msra.mxu0 0
        %490 = vmatprep.subr.bf16.mxu0 0
        %491 = vmatpush1.bf16.msra.mxu0 0
        %492 = vmatprep.subr.bf16.mxu0 0
        %493 = vmatpush1.bf16.msra.mxu0 0
        %494 = vmatprep.mubr.bf16.mxu0 0
        %495 = vmatmul.mubr.bf16.gmra.mrb[0].mxu0 %v253
        %v496 = vpop.f32.mrb[0].mxu0
        %v497 = vadd.f32 0.0, %v496
        %v498 = vpop.f32.mrb[0].mxu0
        %v499 = vpop.f32.mrb[0].mxu0
        %v500 = vadd.f32 0.0, %v499
        %v501 = vpop.f32.mrb[0].mxu0
        %502 = vmatprep.mubr.bf16.mxu0 0
        %503 = vmatmul.mubr.bf16.gmra.mrb[0].mxu0 %v254
        %v504 = vpop.f32.mrb[0].mxu0
        %v505 = vadd.f32 0.0, %v504
        %v506 = vpop.f32.mrb[0].mxu0
        %v507 = vpop.f32.mrb[0].mxu0
        %v508 = vadd.f32 0.0, %v507
        %v509 = vpop.f32.mrb[0].mxu0
        %510 = vmatprep.mubr.bf16.mxu0 0
        %511 = vmatmul.mubr.bf16.gmra.mrb[0].mxu0 %v255
        %v512 = vpop.f32.mrb[0].mxu0
        %v513 = vadd.f32 0.0, %v512
        %v514 = vpop.f32.mrb[0].mxu0
        %v515 = vpop.f32.mrb[0].mxu0
        %v516 = vadd.f32 0.0, %v515
        %v517 = vpop.f32.mrb[0].mxu0
        %518 = vmatprep.mubr.bf16.mxu0 0
        %519 = vmatmul.mubr.bf16.gmra.mrb[0].mxu0 %v256
        %v520 = vpop.f32.mrb[0].mxu0
        %v521 = vadd.f32 0.0, %v520
        %v522 = vpop.f32.mrb[0].mxu0
        %v523 = vpop.f32.mrb[0].mxu0
        %v524 = vadd.f32 0.0, %v523
        %v525 = vpop.f32.mrb[0].mxu0
        %526 = vdwg.mxu0
        %v527 = vpack.c.bf16 %v428, %v424
        %v528 = vpack.c.bf16 %v430, %v426
        %v529 = vpack.c.bf16 %v500, %v497
        %v530 = vpack.c.bf16 %v438, %v434
        %v531 = vpack.c.bf16 %v440, %v436
        %v532 = vpack.c.bf16 %v508, %v505
        %v533 = vpack.c.bf16 %v448, %v444
        %v534 = vpack.c.bf16 %v450, %v446
        %v535 = vpack.c.bf16 %v516, %v513
        %v536 = vpack.c.bf16 %v458, %v454
        %v537 = vpack.c.bf16 %v460, %v456
        %v538 = vpack.c.bf16 %v524, %v521
        %v539 = vlaneseq
        %v540 = vshrl.u32 %v539, 7
        %v541 = vadd.s32 %v540, 8
        %v542 = vadd.s32 %v540, 16
        %v543 = vadd.s32 %v540, 24
        %v544 = vadd.s32 %v540, 32
        %v545 = vadd.s32 %v540, 40
        %v546 = vadd.s32 %v540, 48
        %v547 = vadd.s32 %v540, 56
        %v548 = vlaneseq
        %v549 = vand.u32 %v548, 127
        %vm550 = vcmp.le.s32.totalorder %v549, %v540
        %vm551 = vcmp.le.s32.totalorder %v549, %v541
        %vm552 = vcmp.le.s32.totalorder %v549, %v542
        %vm553 = vcmp.le.s32.totalorder %v549, %v543
        %vm554 = vcmp.le.s32.totalorder %v549, %v544
        %vm555 = vcmp.le.s32.totalorder %v549, %v545
        %vm556 = vcmp.le.s32.totalorder %v549, %v546
        %vm557 = vcmp.le.s32.totalorder %v549, %v547
        %v558 = vsel %vm550, 0.0, -1e+30
        %v559 = vsel %vm551, 0.0, -1e+30
        %v560 = vsel %vm552, 0.0, -1e+30
        %v561 = vsel %vm553, 0.0, -1e+30
        %v562 = vsel %vm554, 0.0, -1e+30
        %v563 = vsel %vm555, 0.0, -1e+30
        %v564 = vsel %vm556, 0.0, -1e+30
        %v565 = vsel %vm557, 0.0, -1e+30
        %v566 = vld [vmem:[%s2] sm:$0xf]
        %v567 = vld [vmem:[%s2 + $0x4] sm:$0xf]
        %v568 = vld [vmem:[%s2 + $0x8] sm:$0xf]
        %v569 = vld [vmem:[%s2 + $0xc] sm:$0xf]
        %v570 = vld [vmem:[%s2 + $0x10] sm:$0xf]
        %v571 = vld [vmem:[%s2 + $0x14] sm:$0xf]
        %v572 = vld [vmem:[%s2 + $0x18] sm:$0xf]
        %v573 = vld [vmem:[%s2 + $0x1c] sm:$0xf]
        %v574 = vld [vmem:[%s2 + $0x20] sm:$0xf]
        %v575 = vld [vmem:[%s2 + $0x24] sm:$0xf]
        %v576 = vld [vmem:[%s2 + $0x28] sm:$0xf]
        %v577 = vld [vmem:[%s2 + $0x2c] sm:$0xf]
        %v578 = vld [vmem:[%s2 + $0x30] sm:$0xf]
        %v579 = vld [vmem:[%s2 + $0x34] sm:$0xf]
        %v580 = vld [vmem:[%s2 + $0x38] sm:$0xf]
        %v581 = vld [vmem:[%s2 + $0x3c] sm:$0xf]
        %v582 = vld [vmem:[%s3] sm:$0x1]
        %vm583 = vcmask 261120
        %v585 = vsel %vm583, %v527, 0
        %v588 = vsel %vm583, %v530, 0
        %v591 = vsel %vm583, %v533, 0
        %v594 = vsel %vm583, %v536, 0
        %v597 = vsel %vm583, %v528, 0
        %v600 = vsel %vm583, %v531, 0
        %v603 = vsel %vm583, %v534, 0
        %v606 = vsel %vm583, %v537, 0
        %608 = vmatprep.subr.bf16.mxu0 0
        %609 = vmatpush1.bf16.xpose.msra.mxu0 %v597
        %610 = vmatprep.subr.bf16.mxu0 0
        %611 = vmatpush1.bf16.xpose.msra.mxu0 %v600
        %612 = vmatprep.subr.bf16.mxu0 0
        %613 = vmatpush1.bf16.xpose.msra.mxu0 %v603
        %614 = vmatprep.subr.bf16.mxu0 0
        %615 = vmatpush1.bf16.xpose.msra.mxu0 %v606
        %616 = vmatprep.subr.bf16.mxu0 0
        %617 = vmatpush1.bf16.xpose.msra.mxu0 0
        %618 = vmatprep.subr.bf16.mxu0 0
        %619 = vmatpush1.bf16.xpose.msra.mxu0 0
        %620 = vmatprep.subr.bf16.mxu0 0
        %621 = vmatpush1.bf16.xpose.msra.mxu0 0
        %622 = vmatprep.subr.bf16.mxu0 0
        %623 = vmatpush1.bf16.xpose.msra.mxu0 0
        %624 = vmatprep.subr.bf16.mxu0 0
        %625 = vmatpush1.bf16.xpose.msra.mxu0 0
        %626 = vmatprep.subr.bf16.mxu0 0
        %627 = vmatpush1.bf16.xpose.msra.mxu0 0
        %628 = vmatprep.subr.bf16.mxu0 0
        %629 = vmatpush1.bf16.xpose.msra.mxu0 0
        %630 = vmatprep.subr.bf16.mxu0 0
        %631 = vmatpush1.bf16.xpose.msra.mxu0 0
        %632 = vmatprep.subr.bf16.mxu0 0
        %633 = vmatpush1.bf16.xpose.msra.mxu0 0
        %634 = vmatprep.subr.bf16.mxu0 0
        %635 = vmatpush1.bf16.xpose.msra.mxu0 0
        %636 = vmatprep.subr.bf16.mxu0 0
        %637 = vmatpush1.bf16.xpose.msra.mxu0 0
        %638 = vmatprep.subr.bf16.mxu0 0
        %639 = vmatpush1.bf16.xpose.msra.mxu0 0
        %640 = vmatprep.mubr.bf16.mxu0 0
        %641 = vmatmul.mubr.bf16.gmra.mrb[0].mxu0 %v585
        %v642 = vpop.f32.mrb[0].mxu0
        %v643 = vadd.f32 %v558, %v642
        %v644 = vpop.f32.mrb[0].mxu0
        %v645 = vpop.f32.mrb[0].mxu0
        %v646 = vadd.f32 %v559, %v645
        %v647 = vpop.f32.mrb[0].mxu0
        %648 = vmatprep.mubr.bf16.mxu0 0
        %649 = vmatmul.mubr.bf16.gmra.mrb[0].mxu0 %v588
        %v650 = vpop.f32.mrb[0].mxu0
        %v651 = vadd.f32 %v560, %v650
        %v652 = vpop.f32.mrb[0].mxu0
        %v653 = vpop.f32.mrb[0].mxu0
        %v654 = vadd.f32 %v561, %v653
        %v655 = vpop.f32.mrb[0].mxu0
        %656 = vmatprep.mubr.bf16.mxu0 0
        %657 = vmatmul.mubr.bf16.gmra.mrb[0].mxu0 %v591
        %v658 = vpop.f32.mrb[0].mxu0
        %v659 = vadd.f32 %v562, %v658
        %v660 = vpop.f32.mrb[0].mxu0
        %v661 = vpop.f32.mrb[0].mxu0
        %v662 = vadd.f32 %v563, %v661
        %v663 = vpop.f32.mrb[0].mxu0
        %664 = vmatprep.mubr.bf16.mxu0 0
        %665 = vmatmul.mubr.bf16.gmra.mrb[0].mxu0 %v594
        %v666 = vpop.f32.mrb[0].mxu0
        %v667 = vadd.f32 %v564, %v666
        %v668 = vpop.f32.mrb[0].mxu0
        %v669 = vpop.f32.mrb[0].mxu0
        %v670 = vadd.f32 %v565, %v669
        %v671 = vpop.f32.mrb[0].mxu0
        %672 = vdwg.mxu0
        %vm673 = vcmask 523264
        %v674 = vsel %vm673, %v643, -inf
        %675 = vmax.xlane.f32.xlu0 %v674
        %v676 = vpop.xlane.xlu0 %675
        %v677 = vsel %vm673, %v646, -inf
        %678 = vmax.xlane.f32.xlu0 %v677
        %v679 = vpop.xlane.xlu0 %678
        %v680 = vsel %vm673, %v651, -inf
        %681 = vmax.xlane.f32.xlu0 %v680
        %v682 = vpop.xlane.xlu0 %681
        %v683 = vsel %vm673, %v654, -inf
        %684 = vmax.xlane.f32.xlu0 %v683
        %v685 = vpop.xlane.xlu0 %684
        %v686 = vsel %vm673, %v659, -inf
        %687 = vmax.xlane.f32.xlu0 %v686
        %v688 = vpop.xlane.xlu0 %687
        %v689 = vsel %vm673, %v662, -inf
        %690 = vmax.xlane.f32.xlu0 %v689
        %v691 = vpop.xlane.xlu0 %690
        %v692 = vsel %vm673, %v667, -inf
        %693 = vmax.xlane.f32.xlu0 %v692
        %v694 = vpop.xlane.xlu0 %693
        %v695 = vsel %vm673, %v670, -inf
        %696 = vmax.xlane.f32.xlu0 %v695
        %v697 = vpop.xlane.xlu0 %696
        %v698 = vsub.f32 %v643, %v676
        %v699 = vsub.f32 %v646, %v679
        %v700 = vsub.f32 %v651, %v682
        %v701 = vsub.f32 %v654, %v685
        %v702 = vsub.f32 %v659, %v688
        %v703 = vsub.f32 %v662, %v691
        %v704 = vsub.f32 %v667, %v694
        %v705 = vsub.f32 %v670, %v697
        %v706 = vmul.f32 %v698, 1.442695
        %v707 = vpow.pop %v706
        %v708 = vmul.f32 %v699, 1.442695
        %v709 = vpow.pop %v708
        %v710 = vmul.f32 %v700, 1.442695
        %v711 = vpow.pop %v710
        %v712 = vmul.f32 %v701, 1.442695
        %v713 = vpow.pop %v712
        %v714 = vmul.f32 %v702, 1.442695
        %v715 = vpow.pop %v714
        %v716 = vmul.f32 %v703, 1.442695
        %v717 = vpow.pop %v716
        %v718 = vmul.f32 %v704, 1.442695
        %v719 = vpow.pop %v718
        %v720 = vmul.f32 %v705, 1.442695
        %v721 = vpow.pop %v720
        %v722 = vsel %vm673, %v707, 0.0
        %723 = vadd.xlane.f32.xlu0 %v722
        %v724 = vpop.xlane.xlu0 %723
        %v725 = vsel %vm673, %v709, 0.0
        %726 = vadd.xlane.f32.xlu0 %v725
        %v727 = vpop.xlane.xlu0 %726
        %v728 = vsel %vm673, %v711, 0.0
        %729 = vadd.xlane.f32.xlu0 %v728
        %v730 = vpop.xlane.xlu0 %729
        %v731 = vsel %vm673, %v713, 0.0
        %732 = vadd.xlane.f32.xlu0 %v731
        %v733 = vpop.xlane.xlu0 %732
        %v734 = vsel %vm673, %v715, 0.0
        %735 = vadd.xlane.f32.xlu0 %v734
        %v736 = vpop.xlane.xlu0 %735
        %v737 = vsel %vm673, %v717, 0.0
        %738 = vadd.xlane.f32.xlu0 %v737
        %v739 = vpop.xlane.xlu0 %738
        %v740 = vsel %vm673, %v719, 0.0
        %741 = vadd.xlane.f32.xlu0 %v740
        %v742 = vpop.xlane.xlu0 %741
        %v743 = vsel %vm673, %v721, 0.0
        %744 = vadd.xlane.f32.xlu0 %v743
        %v745 = vpop.xlane.xlu0 %744
        %v746 = vrcp.pop %v724
        %v747 = vrcp.pop %v727
        %v748 = vrcp.pop %v730
        %v749 = vrcp.pop %v733
        %v750 = vrcp.pop %v736
        %v751 = vrcp.pop %v739
        %v752 = vrcp.pop %v742
        %v753 = vrcp.pop %v745
        %v754 = vmul.f32 %v707, %v746
        %v755 = vmul.f32 %v709, %v747
        %v756 = vmul.f32 %v711, %v748
        %v757 = vmul.f32 %v713, %v749
        %v758 = vmul.f32 %v715, %v750
        %v759 = vmul.f32 %v717, %v751
        %v760 = vmul.f32 %v719, %v752
        %v761 = vmul.f32 %v721, %v753
        %v762 = vpack.c.bf16 %v755, %v754
        %v763 = vpack.c.bf16 %v757, %v756
        %v764 = vpack.c.bf16 %v759, %v758
        %v765 = vpack.c.bf16 %v761, %v760
        %v767 = vsel %vm673, %v762, 0
        %v770 = vsel %vm673, %v763, 0
        %v773 = vsel %vm673, %v764, 0
        %v776 = vsel %vm673, %v765, 0
        %778 = vmatprep.subr.bf16.mxu0 0
        %779 = vmatpush1.bf16.msra.mxu0 %v529
        %780 = vmatprep.subr.bf16.mxu0 0
        %781 = vmatpush1.bf16.msra.mxu0 %v532
        %782 = vmatprep.subr.bf16.mxu0 0
        %783 = vmatpush1.bf16.msra.mxu0 %v535
        %784 = vmatprep.subr.bf16.mxu0 0
        %785 = vmatpush1.bf16.msra.mxu0 %v538
        %786 = vmatprep.subr.bf16.mxu0 0
        %787 = vmatpush1.bf16.msra.mxu0 0
        %788 = vmatprep.subr.bf16.mxu0 0
        %789 = vmatpush1.bf16.msra.mxu0 0
        %790 = vmatprep.subr.bf16.mxu0 0
        %791 = vmatpush1.bf16.msra.mxu0 0
        %792 = vmatprep.subr.bf16.mxu0 0
        %793 = vmatpush1.bf16.msra.mxu0 0
        %794 = vmatprep.subr.bf16.mxu0 0
        %795 = vmatpush1.bf16.msra.mxu0 0
        %796 = vmatprep.subr.bf16.mxu0 0
        %797 = vmatpush1.bf16.msra.mxu0 0
        %798 = vmatprep.subr.bf16.mxu0 0
        %799 = vmatpush1.bf16.msra.mxu0 0
        %800 = vmatprep.subr.bf16.mxu0 0
        %801 = vmatpush1.bf16.msra.mxu0 0
        %802 = vmatprep.subr.bf16.mxu0 0
        %803 = vmatpush1.bf16.msra.mxu0 0
        %804 = vmatprep.subr.bf16.mxu0 0
        %805 = vmatpush1.bf16.msra.mxu0 0
        %806 = vmatprep.subr.bf16.mxu0 0
        %807 = vmatpush1.bf16.msra.mxu0 0
        %808 = vmatprep.subr.bf16.mxu0 0
        %809 = vmatpush1.bf16.msra.mxu0 0
        %810 = vmatprep.mubr.bf16.mxu0 0
        %811 = vmatmul.mubr.bf16.gmra.mrb[0].mxu0 %v767
        %v812 = vpop.f32.mrb[0].mxu0
        %v813 = vadd.f32 0.0, %v812
        %v814 = vpop.f32.mrb[0].mxu0
        %v815 = vpop.f32.mrb[0].mxu0
        %v816 = vadd.f32 0.0, %v815
        %v817 = vpop.f32.mrb[0].mxu0
        %818 = vmatprep.mubr.bf16.mxu0 0
        %819 = vmatmul.mubr.bf16.gmra.mrb[0].mxu0 %v770
        %v820 = vpop.f32.mrb[0].mxu0
        %v821 = vadd.f32 0.0, %v820
        %v822 = vpop.f32.mrb[0].mxu0
        %v823 = vpop.f32.mrb[0].mxu0
        %v824 = vadd.f32 0.0, %v823
        %v825 = vpop.f32.mrb[0].mxu0
        %826 = vmatprep.mubr.bf16.mxu0 0
        %827 = vmatmul.mubr.bf16.gmra.mrb[0].mxu0 %v773
        %v828 = vpop.f32.mrb[0].mxu0
        %v829 = vadd.f32 0.0, %v828
        %v830 = vpop.f32.mrb[0].mxu0
        %v831 = vpop.f32.mrb[0].mxu0
        %v832 = vadd.f32 0.0, %v831
        %v833 = vpop.f32.mrb[0].mxu0
        %834 = vmatprep.mubr.bf16.mxu0 0
        %835 = vmatmul.mubr.bf16.gmra.mrb[0].mxu0 %v776
        %v836 = vpop.f32.mrb[0].mxu0
        %v837 = vadd.f32 0.0, %v836
        %v838 = vpop.f32.mrb[0].mxu0
        %v839 = vpop.f32.mrb[0].mxu0
        %v840 = vadd.f32 0.0, %v839
        %v841 = vpop.f32.mrb[0].mxu0
        %842 = vdwg.mxu0
        %v843 = vpack.c.bf16 %v816, %v813
        %v844 = vpack.c.bf16 %v824, %v821
        %v845 = vpack.c.bf16 %v832, %v829
        %v846 = vpack.c.bf16 %v840, %v837
        %851 = vrot.lane.b32.xlu0 %v527, 96
        %v852 = vpop.permute.xlu0 %851
        %853 = vrot.lane.b32.xlu0 %v530, 96
        %v854 = vpop.permute.xlu0 %853
        %855 = vrot.lane.b32.xlu0 %v533, 96
        %v856 = vpop.permute.xlu0 %855
        %857 = vrot.lane.b32.xlu0 %v536, 96
        %v858 = vpop.permute.xlu0 %857
        %863 = vrot.lane.b32.xlu0 %v528, 96
        %v864 = vpop.permute.xlu0 %863
        %865 = vrot.lane.b32.xlu0 %v531, 96
        %v866 = vpop.permute.xlu0 %865
        %867 = vrot.lane.b32.xlu0 %v534, 96
        %v868 = vpop.permute.xlu0 %867
        %869 = vrot.lane.b32.xlu0 %v537, 96
        %v870 = vpop.permute.xlu0 %869
        %v872 = vsel %vm583, %v852, 0
        %v875 = vsel %vm583, %v854, 0
        %v878 = vsel %vm583, %v856, 0
        %v881 = vsel %vm583, %v858, 0
        %v884 = vsel %vm583, %v864, 0
        %v887 = vsel %vm583, %v866, 0
        %v890 = vsel %vm583, %v868, 0
        %v893 = vsel %vm583, %v870, 0
        %895 = vmatprep.subr.bf16.mxu0 0
        %896 = vmatpush1.bf16.xpose.msra.mxu0 %v884
        %897 = vmatprep.subr.bf16.mxu0 0
        %898 = vmatpush1.bf16.xpose.msra.mxu0 %v887
        %899 = vmatprep.subr.bf16.mxu0 0
        %900 = vmatpush1.bf16.xpose.msra.mxu0 %v890
        %901 = vmatprep.subr.bf16.mxu0 0
        %902 = vmatpush1.bf16.xpose.msra.mxu0 %v893
        %903 = vmatprep.subr.bf16.mxu0 0
        %904 = vmatpush1.bf16.xpose.msra.mxu0 0
        %905 = vmatprep.subr.bf16.mxu0 0
        %906 = vmatpush1.bf16.xpose.msra.mxu0 0
        %907 = vmatprep.subr.bf16.mxu0 0
        %908 = vmatpush1.bf16.xpose.msra.mxu0 0
        %909 = vmatprep.subr.bf16.mxu0 0
        %910 = vmatpush1.bf16.xpose.msra.mxu0 0
        %911 = vmatprep.subr.bf16.mxu0 0
        %912 = vmatpush1.bf16.xpose.msra.mxu0 0
        %913 = vmatprep.subr.bf16.mxu0 0
        %914 = vmatpush1.bf16.xpose.msra.mxu0 0
        %915 = vmatprep.subr.bf16.mxu0 0
        %916 = vmatpush1.bf16.xpose.msra.mxu0 0
        %917 = vmatprep.subr.bf16.mxu0 0
        %918 = vmatpush1.bf16.xpose.msra.mxu0 0
        %919 = vmatprep.subr.bf16.mxu0 0
        %920 = vmatpush1.bf16.xpose.msra.mxu0 0
        %921 = vmatprep.subr.bf16.mxu0 0
        %922 = vmatpush1.bf16.xpose.msra.mxu0 0
        %923 = vmatprep.subr.bf16.mxu0 0
        %924 = vmatpush1.bf16.xpose.msra.mxu0 0
        %925 = vmatprep.subr.bf16.mxu0 0
        %926 = vmatpush1.bf16.xpose.msra.mxu0 0
        %927 = vmatprep.mubr.bf16.mxu0 0
        %928 = vmatmul.mubr.bf16.gmra.mrb[0].mxu0 %v872
        %v929 = vpop.f32.mrb[0].mxu0
        %v930 = vadd.f32 %v558, %v929
        %v931 = vpop.f32.mrb[0].mxu0
        %v932 = vpop.f32.mrb[0].mxu0
        %v933 = vadd.f32 %v559, %v932
        %v934 = vpop.f32.mrb[0].mxu0
        %935 = vmatprep.mubr.bf16.mxu0 0
        %936 = vmatmul.mubr.bf16.gmra.mrb[0].mxu0 %v875
        %v937 = vpop.f32.mrb[0].mxu0
        %v938 = vadd.f32 %v560, %v937
        %v939 = vpop.f32.mrb[0].mxu0
        %v940 = vpop.f32.mrb[0].mxu0
        %v941 = vadd.f32 %v561, %v940
        %v942 = vpop.f32.mrb[0].mxu0
        %943 = vmatprep.mubr.bf16.mxu0 0
        %944 = vmatmul.mubr.bf16.gmra.mrb[0].mxu0 %v878
        %v945 = vpop.f32.mrb[0].mxu0
        %v946 = vadd.f32 %v562, %v945
        %v947 = vpop.f32.mrb[0].mxu0
        %v948 = vpop.f32.mrb[0].mxu0
        %v949 = vadd.f32 %v563, %v948
        %v950 = vpop.f32.mrb[0].mxu0
        %951 = vmatprep.mubr.bf16.mxu0 0
        %952 = vmatmul.mubr.bf16.gmra.mrb[0].mxu0 %v881
        %v953 = vpop.f32.mrb[0].mxu0
        %v954 = vadd.f32 %v564, %v953
        %v955 = vpop.f32.mrb[0].mxu0
        %v956 = vpop.f32.mrb[0].mxu0
        %v957 = vadd.f32 %v565, %v956
        %v958 = vpop.f32.mrb[0].mxu0
        %959 = vdwg.mxu0
        %v960 = vsel %vm673, %v930, -inf
        %961 = vmax.xlane.f32.xlu0 %v960
        %v962 = vpop.xlane.xlu0 %961
        %v963 = vsel %vm673, %v933, -inf
        %964 = vmax.xlane.f32.xlu0 %v963
        %v965 = vpop.xlane.xlu0 %964
        %v966 = vsel %vm673, %v938, -inf
        %967 = vmax.xlane.f32.xlu0 %v966
        %v968 = vpop.xlane.xlu0 %967
        %v969 = vsel %vm673, %v941, -inf
        %970 = vmax.xlane.f32.xlu0 %v969
        %v971 = vpop.xlane.xlu0 %970
        %v972 = vsel %vm673, %v946, -inf
        %973 = vmax.xlane.f32.xlu0 %v972
        %v974 = vpop.xlane.xlu0 %973
        %v975 = vsel %vm673, %v949, -inf
        %976 = vmax.xlane.f32.xlu0 %v975
        %v977 = vpop.xlane.xlu0 %976
        %v978 = vsel %vm673, %v954, -inf
        %979 = vmax.xlane.f32.xlu0 %v978
        %v980 = vpop.xlane.xlu0 %979
        %v981 = vsel %vm673, %v957, -inf
        %982 = vmax.xlane.f32.xlu0 %v981
        %v983 = vpop.xlane.xlu0 %982
        %v984 = vsub.f32 %v930, %v962
        %v985 = vsub.f32 %v933, %v965
        %v986 = vsub.f32 %v938, %v968
        %v987 = vsub.f32 %v941, %v971
        %v988 = vsub.f32 %v946, %v974
        %v989 = vsub.f32 %v949, %v977
        %v990 = vsub.f32 %v954, %v980
        %v991 = vsub.f32 %v957, %v983
        %v992 = vmul.f32 %v984, 1.442695
        %v993 = vpow.pop %v992
        %v994 = vmul.f32 %v985, 1.442695
        %v995 = vpow.pop %v994
        %v996 = vmul.f32 %v986, 1.442695
        %v997 = vpow.pop %v996
        %v998 = vmul.f32 %v987, 1.442695
        %v999 = vpow.pop %v998
        %v1000 = vmul.f32 %v988, 1.442695
        %v1001 = vpow.pop %v1000
        %v1002 = vmul.f32 %v989, 1.442695
        %v1003 = vpow.pop %v1002
        %v1004 = vmul.f32 %v990, 1.442695
        %v1005 = vpow.pop %v1004
        %v1006 = vmul.f32 %v991, 1.442695
        %v1007 = vpow.pop %v1006
        %v1008 = vsel %vm673, %v993, 0.0
        %1009 = vadd.xlane.f32.xlu0 %v1008
        %v1010 = vpop.xlane.xlu0 %1009
        %v1011 = vsel %vm673, %v995, 0.0
        %1012 = vadd.xlane.f32.xlu0 %v1011
        %v1013 = vpop.xlane.xlu0 %1012
        %v1014 = vsel %vm673, %v997, 0.0
        %1015 = vadd.xlane.f32.xlu0 %v1014
        %v1016 = vpop.xlane.xlu0 %1015
        %v1017 = vsel %vm673, %v999, 0.0
        %1018 = vadd.xlane.f32.xlu0 %v1017
        %v1019 = vpop.xlane.xlu0 %1018
        %v1020 = vsel %vm673, %v1001, 0.0
        %1021 = vadd.xlane.f32.xlu0 %v1020
        %v1022 = vpop.xlane.xlu0 %1021
        %v1023 = vsel %vm673, %v1003, 0.0
        %1024 = vadd.xlane.f32.xlu0 %v1023
        %v1025 = vpop.xlane.xlu0 %1024
        %v1026 = vsel %vm673, %v1005, 0.0
        %1027 = vadd.xlane.f32.xlu0 %v1026
        %v1028 = vpop.xlane.xlu0 %1027
        %v1029 = vsel %vm673, %v1007, 0.0
        %1030 = vadd.xlane.f32.xlu0 %v1029
        %v1031 = vpop.xlane.xlu0 %1030
        %v1032 = vrcp.pop %v1010
        %v1033 = vrcp.pop %v1013
        %v1034 = vrcp.pop %v1016
        %v1035 = vrcp.pop %v1019
        %v1036 = vrcp.pop %v1022
        %v1037 = vrcp.pop %v1025
        %v1038 = vrcp.pop %v1028
        %v1039 = vrcp.pop %v1031
        %v1040 = vmul.f32 %v993, %v1032
        %v1041 = vmul.f32 %v995, %v1033
        %v1042 = vmul.f32 %v997, %v1034
        %v1043 = vmul.f32 %v999, %v1035
        %v1044 = vmul.f32 %v1001, %v1036
        %v1045 = vmul.f32 %v1003, %v1037
        %v1046 = vmul.f32 %v1005, %v1038
        %v1047 = vmul.f32 %v1007, %v1039
        %v1048 = vpack.c.bf16 %v1041, %v1040
        %v1049 = vpack.c.bf16 %v1043, %v1042
        %v1050 = vpack.c.bf16 %v1045, %v1044
        %v1051 = vpack.c.bf16 %v1047, %v1046
        %1056 = vrot.lane.b32.xlu0 %v529, 96
        %v1057 = vpop.permute.xlu0 %1056
        %1058 = vrot.lane.b32.xlu0 %v532, 96
        %v1059 = vpop.permute.xlu0 %1058
        %1060 = vrot.lane.b32.xlu0 %v535, 96
        %v1061 = vpop.permute.xlu0 %1060
        %1062 = vrot.lane.b32.xlu0 %v538, 96
        %v1063 = vpop.permute.xlu0 %1062
        %v1069 = vsel %vm673, %v1048, 0
        %v1072 = vsel %vm673, %v1049, 0
        %v1075 = vsel %vm673, %v1050, 0
        %v1078 = vsel %vm673, %v1051, 0
        %1080 = vmatprep.subr.bf16.mxu0 0
        %1081 = vmatpush1.bf16.msra.mxu0 %v1057
        %1082 = vmatprep.subr.bf16.mxu0 0
        %1083 = vmatpush1.bf16.msra.mxu0 %v1059
        %1084 = vmatprep.subr.bf16.mxu0 0
        %1085 = vmatpush1.bf16.msra.mxu0 %v1061
        %1086 = vmatprep.subr.bf16.mxu0 0
        %1087 = vmatpush1.bf16.msra.mxu0 %v1063
        %1088 = vmatprep.subr.bf16.mxu0 0
        %1089 = vmatpush1.bf16.msra.mxu0 0
        %1090 = vmatprep.subr.bf16.mxu0 0
        %1091 = vmatpush1.bf16.msra.mxu0 0
        %1092 = vmatprep.subr.bf16.mxu0 0
        %1093 = vmatpush1.bf16.msra.mxu0 0
        %1094 = vmatprep.subr.bf16.mxu0 0
        %1095 = vmatpush1.bf16.msra.mxu0 0
        %1096 = vmatprep.subr.bf16.mxu0 0
        %1097 = vmatpush1.bf16.msra.mxu0 0
        %1098 = vmatprep.subr.bf16.mxu0 0
        %1099 = vmatpush1.bf16.msra.mxu0 0
        %1100 = vmatprep.subr.bf16.mxu0 0
        %1101 = vmatpush1.bf16.msra.mxu0 0
        %1102 = vmatprep.subr.bf16.mxu0 0
        %1103 = vmatpush1.bf16.msra.mxu0 0
        %1104 = vmatprep.subr.bf16.mxu0 0
        %1105 = vmatpush1.bf16.msra.mxu0 0
        %1106 = vmatprep.subr.bf16.mxu0 0
        %1107 = vmatpush1.bf16.msra.mxu0 0
        %1108 = vmatprep.subr.bf16.mxu0 0
        %1109 = vmatpush1.bf16.msra.mxu0 0
        %1110 = vmatprep.subr.bf16.mxu0 0
        %1111 = vmatpush1.bf16.msra.mxu0 0
        %1112 = vmatprep.mubr.bf16.mxu0 0
        %1113 = vmatmul.mubr.bf16.gmra.mrb[0].mxu0 %v1069
        %v1114 = vpop.f32.mrb[0].mxu0
        %v1115 = vadd.f32 0.0, %v1114
        %v1116 = vpop.f32.mrb[0].mxu0
        %v1117 = vpop.f32.mrb[0].mxu0
        %v1118 = vadd.f32 0.0, %v1117
        %v1119 = vpop.f32.mrb[0].mxu0
        %1120 = vmatprep.mubr.bf16.mxu0 0
        %1121 = vmatmul.mubr.bf16.gmra.mrb[0].mxu0 %v1072
        %v1122 = vpop.f32.mrb[0].mxu0
        %v1123 = vadd.f32 0.0, %v1122
        %v1124 = vpop.f32.mrb[0].mxu0
        %v1125 = vpop.f32.mrb[0].mxu0
        %v1126 = vadd.f32 0.0, %v1125
        %v1127 = vpop.f32.mrb[0].mxu0
        %1128 = vmatprep.mubr.bf16.mxu0 0
        %1129 = vmatmul.mubr.bf16.gmra.mrb[0].mxu0 %v1075
        %v1130 = vpop.f32.mrb[0].mxu0
        %v1131 = vadd.f32 0.0, %v1130
        %v1132 = vpop.f32.mrb[0].mxu0
        %v1133 = vpop.f32.mrb[0].mxu0
        %v1134 = vadd.f32 0.0, %v1133
        %v1135 = vpop.f32.mrb[0].mxu0
        %1136 = vmatprep.mubr.bf16.mxu0 0
        %1137 = vmatmul.mubr.bf16.gmra.mrb[0].mxu0 %v1078
        %v1138 = vpop.f32.mrb[0].mxu0
        %v1139 = vadd.f32 0.0, %v1138
        %v1140 = vpop.f32.mrb[0].mxu0
        %v1141 = vpop.f32.mrb[0].mxu0
        %v1142 = vadd.f32 0.0, %v1141
        %v1143 = vpop.f32.mrb[0].mxu0
        %1144 = vdwg.mxu0
        %v1145 = vpack.c.bf16 %v1118, %v1115
        %v1146 = vpack.c.bf16 %v1126, %v1123
        %v1147 = vpack.c.bf16 %v1134, %v1131
        %v1148 = vpack.c.bf16 %v1142, %v1139
        %v1153 = vunpack.c.l.b16 %v570
        %v1154 = vunpack.c.l.b16 %v571
        %v1155 = vunpack.c.l.b16 %v572
        %v1156 = vunpack.c.l.b16 %v573
        %v1157 = vpack.c.b16 %v1154, %v1153
        %v1158 = vpack.c.b16 %v1156, %v1155
        %v1162 = vsel %vm583, %v1145, 0
        %v1165 = vsel %vm583, %v1146, 0
        %v1168 = vsel %vm583, %v1147, 0
        %v1171 = vsel %vm583, %v1148, 0
        %1173 = vmatprep.subr.bf16.mxu0 0
        %1174 = vmatpush1.bf16.msra.mxu0 %v1157
        %1175 = vmatprep.subr.bf16.mxu0 0
        %1176 = vmatpush1.bf16.msra.mxu0 %v1158
        %1177 = vmatprep.subr.bf16.mxu0 0
        %1178 = vmatpush1.bf16.msra.mxu0 0
        %1179 = vmatprep.subr.bf16.mxu0 0
        %1180 = vmatpush1.bf16.msra.mxu0 0
        %1181 = vmatprep.subr.bf16.mxu0 0
        %1182 = vmatpush1.bf16.msra.mxu0 0
        %1183 = vmatprep.subr.bf16.mxu0 0
        %1184 = vmatpush1.bf16.msra.mxu0 0
        %1185 = vmatprep.subr.bf16.mxu0 0
        %1186 = vmatpush1.bf16.msra.mxu0 0
        %1187 = vmatprep.subr.bf16.mxu0 0
        %1188 = vmatpush1.bf16.msra.mxu0 0
        %1189 = vmatprep.subr.bf16.mxu0 0
        %1190 = vmatpush1.bf16.msra.mxu0 0
        %1191 = vmatprep.subr.bf16.mxu0 0
        %1192 = vmatpush1.bf16.msra.mxu0 0
        %1193 = vmatprep.subr.bf16.mxu0 0
        %1194 = vmatpush1.bf16.msra.mxu0 0
        %1195 = vmatprep.subr.bf16.mxu0 0
        %1196 = vmatpush1.bf16.msra.mxu0 0
        %1197 = vmatprep.subr.bf16.mxu0 0
        %1198 = vmatpush1.bf16.msra.mxu0 0
        %1199 = vmatprep.subr.bf16.mxu0 0
        %1200 = vmatpush1.bf16.msra.mxu0 0
        %1201 = vmatprep.subr.bf16.mxu0 0
        %1202 = vmatpush1.bf16.msra.mxu0 0
        %1203 = vmatprep.subr.bf16.mxu0 0
        %1204 = vmatpush1.bf16.msra.mxu0 0
        %1205 = vmatprep.mubr.bf16.mxu0 0
        %1206 = vmatmul.mubr.bf16.gmra.mrb[0].mxu0 %v1162
        %v1207 = vpop.f32.mrb[0].mxu0
        %v1208 = vadd.f32 0.0, %v1207
        %v1209 = vpop.f32.mrb[0].mxu0
        %v1210 = vpop.f32.mrb[0].mxu0
        %v1211 = vadd.f32 0.0, %v1210
        %v1212 = vpop.f32.mrb[0].mxu0
        %1213 = vmatprep.mubr.bf16.mxu0 0
        %1214 = vmatmul.mubr.bf16.gmra.mrb[0].mxu0 %v1165
        %v1215 = vpop.f32.mrb[0].mxu0
        %v1216 = vadd.f32 0.0, %v1215
        %v1217 = vpop.f32.mrb[0].mxu0
        %v1218 = vpop.f32.mrb[0].mxu0
        %v1219 = vadd.f32 0.0, %v1218
        %v1220 = vpop.f32.mrb[0].mxu0
        %1221 = vmatprep.mubr.bf16.mxu0 0
        %1222 = vmatmul.mubr.bf16.gmra.mrb[0].mxu0 %v1168
        %v1223 = vpop.f32.mrb[0].mxu0
        %v1224 = vadd.f32 0.0, %v1223
        %v1225 = vpop.f32.mrb[0].mxu0
        %v1226 = vpop.f32.mrb[0].mxu0
        %v1227 = vadd.f32 0.0, %v1226
        %v1228 = vpop.f32.mrb[0].mxu0
        %1229 = vmatprep.mubr.bf16.mxu0 0
        %1230 = vmatmul.mubr.bf16.gmra.mrb[0].mxu0 %v1171
        %v1231 = vpop.f32.mrb[0].mxu0
        %v1232 = vadd.f32 0.0, %v1231
        %v1233 = vpop.f32.mrb[0].mxu0
        %v1234 = vpop.f32.mrb[0].mxu0
        %v1235 = vadd.f32 0.0, %v1234
        %v1236 = vpop.f32.mrb[0].mxu0
        %1237 = vdwg.mxu0
        %v1242 = vunpack.c.l.b16 %v566
        %v1243 = vunpack.c.l.b16 %v567
        %v1244 = vunpack.c.l.b16 %v568
        %v1245 = vunpack.c.l.b16 %v569
        %v1246 = vpack.c.b16 %v1243, %v1242
        %v1247 = vpack.c.b16 %v1245, %v1244
        %v1251 = vsel %vm583, %v843, 0
        %v1254 = vsel %vm583, %v844, 0
        %v1257 = vsel %vm583, %v845, 0
        %v1260 = vsel %vm583, %v846, 0
        %1262 = vmatprep.subr.bf16.mxu0 0
        %1263 = vmatpush1.bf16.msra.mxu0 %v1246
        %1264 = vmatprep.subr.bf16.mxu0 0
        %1265 = vmatpush1.bf16.msra.mxu0 %v1247
        %1266 = vmatprep.subr.bf16.mxu0 0
        %1267 = vmatpush1.bf16.msra.mxu0 0
        %1268 = vmatprep.subr.bf16.mxu0 0
        %1269 = vmatpush1.bf16.msra.mxu0 0
        %1270 = vmatprep.subr.bf16.mxu0 0
        %1271 = vmatpush1.bf16.msra.mxu0 0
        %1272 = vmatprep.subr.bf16.mxu0 0
        %1273 = vmatpush1.bf16.msra.mxu0 0
        %1274 = vmatprep.subr.bf16.mxu0 0
        %1275 = vmatpush1.bf16.msra.mxu0 0
        %1276 = vmatprep.subr.bf16.mxu0 0
        %1277 = vmatpush1.bf16.msra.mxu0 0
        %1278 = vmatprep.subr.bf16.mxu0 0
        %1279 = vmatpush1.bf16.msra.mxu0 0
        %1280 = vmatprep.subr.bf16.mxu0 0
        %1281 = vmatpush1.bf16.msra.mxu0 0
        %1282 = vmatprep.subr.bf16.mxu0 0
        %1283 = vmatpush1.bf16.msra.mxu0 0
        %1284 = vmatprep.subr.bf16.mxu0 0
        %1285 = vmatpush1.bf16.msra.mxu0 0
        %1286 = vmatprep.subr.bf16.mxu0 0
        %1287 = vmatpush1.bf16.msra.mxu0 0
        %1288 = vmatprep.subr.bf16.mxu0 0
        %1289 = vmatpush1.bf16.msra.mxu0 0
        %1290 = vmatprep.subr.bf16.mxu0 0
        %1291 = vmatpush1.bf16.msra.mxu0 0
        %1292 = vmatprep.subr.bf16.mxu0 0
        %1293 = vmatpush1.bf16.msra.mxu0 0
        %1294 = vmatprep.mubr.bf16.mxu0 0
        %1295 = vmatmul.mubr.bf16.gmra.mrb[0].mxu0 %v1251
        %v1296 = vpop.f32.mrb[0].mxu0
        %v1297 = vadd.f32 %v1208, %v1296
        %v1298 = vpop.f32.mrb[0].mxu0
        %v1299 = vpop.f32.mrb[0].mxu0
        %v1300 = vadd.f32 %v1211, %v1299
        %v1301 = vpop.f32.mrb[0].mxu0
        %1302 = vmatprep.mubr.bf16.mxu0 0
        %1303 = vmatmul.mubr.bf16.gmra.mrb[0].mxu0 %v1254
        %v1304 = vpop.f32.mrb[0].mxu0
        %v1305 = vadd.f32 %v1216, %v1304
        %v1306 = vpop.f32.mrb[0].mxu0
        %v1307 = vpop.f32.mrb[0].mxu0
        %v1308 = vadd.f32 %v1219, %v1307
        %v1309 = vpop.f32.mrb[0].mxu0
        %1310 = vmatprep.mubr.bf16.mxu0 0
        %1311 = vmatmul.mubr.bf16.gmra.mrb[0].mxu0 %v1257
        %v1312 = vpop.f32.mrb[0].mxu0
        %v1313 = vadd.f32 %v1224, %v1312
        %v1314 = vpop.f32.mrb[0].mxu0
        %v1315 = vpop.f32.mrb[0].mxu0
        %v1316 = vadd.f32 %v1227, %v1315
        %v1317 = vpop.f32.mrb[0].mxu0
        %1318 = vmatprep.mubr.bf16.mxu0 0
        %1319 = vmatmul.mubr.bf16.gmra.mrb[0].mxu0 %v1260
        %v1320 = vpop.f32.mrb[0].mxu0
        %v1321 = vadd.f32 %v1232, %v1320
        %v1322 = vpop.f32.mrb[0].mxu0
        %v1323 = vpop.f32.mrb[0].mxu0
        %v1324 = vadd.f32 %v1235, %v1323
        %v1325 = vpop.f32.mrb[0].mxu0
        %1326 = vdwg.mxu0
        %1327 = vrot.lane.b32.xlu0 %v527, 64
        %v1328 = vpop.permute.xlu0 %1327
        %1329 = vrot.lane.b32.xlu0 %v530, 64
        %v1330 = vpop.permute.xlu0 %1329
        %1331 = vrot.lane.b32.xlu0 %v533, 64
        %v1332 = vpop.permute.xlu0 %1331
        %1333 = vrot.lane.b32.xlu0 %v536, 64
        %v1334 = vpop.permute.xlu0 %1333
        %1335 = vrot.lane.b32.xlu0 %v528, 64
        %v1336 = vpop.permute.xlu0 %1335
        %1337 = vrot.lane.b32.xlu0 %v531, 64
        %v1338 = vpop.permute.xlu0 %1337
        %1339 = vrot.lane.b32.xlu0 %v534, 64
        %v1340 = vpop.permute.xlu0 %1339
        %1341 = vrot.lane.b32.xlu0 %v537, 64
        %v1342 = vpop.permute.xlu0 %1341
        %v1344 = vsel %vm583, %v1328, 0
        %v1347 = vsel %vm583, %v1330, 0
        %v1350 = vsel %vm583, %v1332, 0
        %v1353 = vsel %vm583, %v1334, 0
        %v1356 = vsel %vm583, %v1336, 0
        %v1359 = vsel %vm583, %v1338, 0
        %v1362 = vsel %vm583, %v1340, 0
        %v1365 = vsel %vm583, %v1342, 0
        %1367 = vmatprep.subr.bf16.mxu0 0
        %1368 = vmatpush1.bf16.xpose.msra.mxu0 %v1356
        %1369 = vmatprep.subr.bf16.mxu0 0
        %1370 = vmatpush1.bf16.xpose.msra.mxu0 %v1359
        %1371 = vmatprep.subr.bf16.mxu0 0
        %1372 = vmatpush1.bf16.xpose.msra.mxu0 %v1362
        %1373 = vmatprep.subr.bf16.mxu0 0
        %1374 = vmatpush1.bf16.xpose.msra.mxu0 %v1365
        %1375 = vmatprep.subr.bf16.mxu0 0
        %1376 = vmatpush1.bf16.xpose.msra.mxu0 0
        %1377 = vmatprep.subr.bf16.mxu0 0
        %1378 = vmatpush1.bf16.xpose.msra.mxu0 0
        %1379 = vmatprep.subr.bf16.mxu0 0
        %1380 = vmatpush1.bf16.xpose.msra.mxu0 0
        %1381 = vmatprep.subr.bf16.mxu0 0
        %1382 = vmatpush1.bf16.xpose.msra.mxu0 0
        %1383 = vmatprep.subr.bf16.mxu0 0
        %1384 = vmatpush1.bf16.xpose.msra.mxu0 0
        %1385 = vmatprep.subr.bf16.mxu0 0
        %1386 = vmatpush1.bf16.xpose.msra.mxu0 0
        %1387 = vmatprep.subr.bf16.mxu0 0
        %1388 = vmatpush1.bf16.xpose.msra.mxu0 0
        %1389 = vmatprep.subr.bf16.mxu0 0
        %1390 = vmatpush1.bf16.xpose.msra.mxu0 0
        %1391 = vmatprep.subr.bf16.mxu0 0
        %1392 = vmatpush1.bf16.xpose.msra.mxu0 0
        %1393 = vmatprep.subr.bf16.mxu0 0
        %1394 = vmatpush1.bf16.xpose.msra.mxu0 0
        %1395 = vmatprep.subr.bf16.mxu0 0
        %1396 = vmatpush1.bf16.xpose.msra.mxu0 0
        %1397 = vmatprep.subr.bf16.mxu0 0
        %1398 = vmatpush1.bf16.xpose.msra.mxu0 0
        %1399 = vmatprep.mubr.bf16.mxu0 0
        %1400 = vmatmul.mubr.bf16.gmra.mrb[0].mxu0 %v1344
        %v1401 = vpop.f32.mrb[0].mxu0
        %v1402 = vadd.f32 %v558, %v1401
        %v1403 = vpop.f32.mrb[0].mxu0
        %v1404 = vpop.f32.mrb[0].mxu0
        %v1405 = vadd.f32 %v559, %v1404
        %v1406 = vpop.f32.mrb[0].mxu0
        %1407 = vmatprep.mubr.bf16.mxu0 0
        %1408 = vmatmul.mubr.bf16.gmra.mrb[0].mxu0 %v1347
        %v1409 = vpop.f32.mrb[0].mxu0
        %v1410 = vadd.f32 %v560, %v1409
        %v1411 = vpop.f32.mrb[0].mxu0
        %v1412 = vpop.f32.mrb[0].mxu0
        %v1413 = vadd.f32 %v561, %v1412
        %v1414 = vpop.f32.mrb[0].mxu0
        %1415 = vmatprep.mubr.bf16.mxu0 0
        %1416 = vmatmul.mubr.bf16.gmra.mrb[0].mxu0 %v1350
        %v1417 = vpop.f32.mrb[0].mxu0
        %v1418 = vadd.f32 %v562, %v1417
        %v1419 = vpop.f32.mrb[0].mxu0
        %v1420 = vpop.f32.mrb[0].mxu0
        %v1421 = vadd.f32 %v563, %v1420
        %v1422 = vpop.f32.mrb[0].mxu0
        %1423 = vmatprep.mubr.bf16.mxu0 0
        %1424 = vmatmul.mubr.bf16.gmra.mrb[0].mxu0 %v1353
        %v1425 = vpop.f32.mrb[0].mxu0
        %v1426 = vadd.f32 %v564, %v1425
        %v1427 = vpop.f32.mrb[0].mxu0
        %v1428 = vpop.f32.mrb[0].mxu0
        %v1429 = vadd.f32 %v565, %v1428
        %v1430 = vpop.f32.mrb[0].mxu0
        %1431 = vdwg.mxu0
        %v1432 = vsel %vm673, %v1402, -inf
        %1433 = vmax.xlane.f32.xlu0 %v1432
        %v1434 = vpop.xlane.xlu0 %1433
        %v1435 = vsel %vm673, %v1405, -inf
        %1436 = vmax.xlane.f32.xlu0 %v1435
        %v1437 = vpop.xlane.xlu0 %1436
        %v1438 = vsel %vm673, %v1410, -inf
        %1439 = vmax.xlane.f32.xlu0 %v1438
        %v1440 = vpop.xlane.xlu0 %1439
        %v1441 = vsel %vm673, %v1413, -inf
        %1442 = vmax.xlane.f32.xlu0 %v1441
        %v1443 = vpop.xlane.xlu0 %1442
        %v1444 = vsel %vm673, %v1418, -inf
        %1445 = vmax.xlane.f32.xlu0 %v1444
        %v1446 = vpop.xlane.xlu0 %1445
        %v1447 = vsel %vm673, %v1421, -inf
        %1448 = vmax.xlane.f32.xlu0 %v1447
        %v1449 = vpop.xlane.xlu0 %1448
        %v1450 = vsel %vm673, %v1426, -inf
        %1451 = vmax.xlane.f32.xlu0 %v1450
        %v1452 = vpop.xlane.xlu0 %1451
        %v1453 = vsel %vm673, %v1429, -inf
        %1454 = vmax.xlane.f32.xlu0 %v1453
        %v1455 = vpop.xlane.xlu0 %1454
        %v1456 = vsub.f32 %v1402, %v1434
        %v1457 = vsub.f32 %v1405, %v1437
        %v1458 = vsub.f32 %v1410, %v1440
        %v1459 = vsub.f32 %v1413, %v1443
        %v1460 = vsub.f32 %v1418, %v1446
        %v1461 = vsub.f32 %v1421, %v1449
        %v1462 = vsub.f32 %v1426, %v1452
        %v1463 = vsub.f32 %v1429, %v1455
        %v1464 = vmul.f32 %v1456, 1.442695
        %v1465 = vpow.pop %v1464
        %v1466 = vmul.f32 %v1457, 1.442695
        %v1467 = vpow.pop %v1466
        %v1468 = vmul.f32 %v1458, 1.442695
        %v1469 = vpow.pop %v1468
        %v1470 = vmul.f32 %v1459, 1.442695
        %v1471 = vpow.pop %v1470
        %v1472 = vmul.f32 %v1460, 1.442695
        %v1473 = vpow.pop %v1472
        %v1474 = vmul.f32 %v1461, 1.442695
        %v1475 = vpow.pop %v1474
        %v1476 = vmul.f32 %v1462, 1.442695
        %v1477 = vpow.pop %v1476
        %v1478 = vmul.f32 %v1463, 1.442695
        %v1479 = vpow.pop %v1478
        %v1480 = vsel %vm673, %v1465, 0.0
        %1481 = vadd.xlane.f32.xlu0 %v1480
        %v1482 = vpop.xlane.xlu0 %1481
        %v1483 = vsel %vm673, %v1467, 0.0
        %1484 = vadd.xlane.f32.xlu0 %v1483
        %v1485 = vpop.xlane.xlu0 %1484
        %v1486 = vsel %vm673, %v1469, 0.0
        %1487 = vadd.xlane.f32.xlu0 %v1486
        %v1488 = vpop.xlane.xlu0 %1487
        %v1489 = vsel %vm673, %v1471, 0.0
        %1490 = vadd.xlane.f32.xlu0 %v1489
        %v1491 = vpop.xlane.xlu0 %1490
        %v1492 = vsel %vm673, %v1473, 0.0
        %1493 = vadd.xlane.f32.xlu0 %v1492
        %v1494 = vpop.xlane.xlu0 %1493
        %v1495 = vsel %vm673, %v1475, 0.0
        %1496 = vadd.xlane.f32.xlu0 %v1495
        %v1497 = vpop.xlane.xlu0 %1496
        %v1498 = vsel %vm673, %v1477, 0.0
        %1499 = vadd.xlane.f32.xlu0 %v1498
        %v1500 = vpop.xlane.xlu0 %1499
        %v1501 = vsel %vm673, %v1479, 0.0
        %1502 = vadd.xlane.f32.xlu0 %v1501
        %v1503 = vpop.xlane.xlu0 %1502
        %v1504 = vrcp.pop %v1482
        %v1505 = vrcp.pop %v1485
        %v1506 = vrcp.pop %v1488
        %v1507 = vrcp.pop %v1491
        %v1508 = vrcp.pop %v1494
        %v1509 = vrcp.pop %v1497
        %v1510 = vrcp.pop %v1500
        %v1511 = vrcp.pop %v1503
        %v1512 = vmul.f32 %v1465, %v1504
        %v1513 = vmul.f32 %v1467, %v1505
        %v1514 = vmul.f32 %v1469, %v1506
        %v1515 = vmul.f32 %v1471, %v1507
        %v1516 = vmul.f32 %v1473, %v1508
        %v1517 = vmul.f32 %v1475, %v1509
        %v1518 = vmul.f32 %v1477, %v1510
        %v1519 = vmul.f32 %v1479, %v1511
        %v1520 = vpack.c.bf16 %v1513, %v1512
        %v1521 = vpack.c.bf16 %v1515, %v1514
        %v1522 = vpack.c.bf16 %v1517, %v1516
        %v1523 = vpack.c.bf16 %v1519, %v1518
        %1524 = vrot.lane.b32.xlu0 %v529, 64
        %v1525 = vpop.permute.xlu0 %1524
        %1526 = vrot.lane.b32.xlu0 %v532, 64
        %v1527 = vpop.permute.xlu0 %1526
        %1528 = vrot.lane.b32.xlu0 %v535, 64
        %v1529 = vpop.permute.xlu0 %1528
        %1530 = vrot.lane.b32.xlu0 %v538, 64
        %v1531 = vpop.permute.xlu0 %1530
        %v1537 = vsel %vm673, %v1520, 0
        %v1540 = vsel %vm673, %v1521, 0
        %v1543 = vsel %vm673, %v1522, 0
        %v1546 = vsel %vm673, %v1523, 0
        %1548 = vmatprep.subr.bf16.mxu0 0
        %1549 = vmatpush1.bf16.msra.mxu0 %v1525
        %1550 = vmatprep.subr.bf16.mxu0 0
        %1551 = vmatpush1.bf16.msra.mxu0 %v1527
        %1552 = vmatprep.subr.bf16.mxu0 0
        %1553 = vmatpush1.bf16.msra.mxu0 %v1529
        %1554 = vmatprep.subr.bf16.mxu0 0
        %1555 = vmatpush1.bf16.msra.mxu0 %v1531
        %1556 = vmatprep.subr.bf16.mxu0 0
        %1557 = vmatpush1.bf16.msra.mxu0 0
        %1558 = vmatprep.subr.bf16.mxu0 0
        %1559 = vmatpush1.bf16.msra.mxu0 0
        %1560 = vmatprep.subr.bf16.mxu0 0
        %1561 = vmatpush1.bf16.msra.mxu0 0
        %1562 = vmatprep.subr.bf16.mxu0 0
        %1563 = vmatpush1.bf16.msra.mxu0 0
        %1564 = vmatprep.subr.bf16.mxu0 0
        %1565 = vmatpush1.bf16.msra.mxu0 0
        %1566 = vmatprep.subr.bf16.mxu0 0
        %1567 = vmatpush1.bf16.msra.mxu0 0
        %1568 = vmatprep.subr.bf16.mxu0 0
        %1569 = vmatpush1.bf16.msra.mxu0 0
        %1570 = vmatprep.subr.bf16.mxu0 0
        %1571 = vmatpush1.bf16.msra.mxu0 0
        %1572 = vmatprep.subr.bf16.mxu0 0
        %1573 = vmatpush1.bf16.msra.mxu0 0
        %1574 = vmatprep.subr.bf16.mxu0 0
        %1575 = vmatpush1.bf16.msra.mxu0 0
        %1576 = vmatprep.subr.bf16.mxu0 0
        %1577 = vmatpush1.bf16.msra.mxu0 0
        %1578 = vmatprep.subr.bf16.mxu0 0
        %1579 = vmatpush1.bf16.msra.mxu0 0
        %1580 = vmatprep.mubr.bf16.mxu0 0
        %1581 = vmatmul.mubr.bf16.gmra.mrb[0].mxu0 %v1537
        %v1582 = vpop.f32.mrb[0].mxu0
        %v1583 = vadd.f32 0.0, %v1582
        %v1584 = vpop.f32.mrb[0].mxu0
        %v1585 = vpop.f32.mrb[0].mxu0
        %v1586 = vadd.f32 0.0, %v1585
        %v1587 = vpop.f32.mrb[0].mxu0
        %1588 = vmatprep.mubr.bf16.mxu0 0
        %1589 = vmatmul.mubr.bf16.gmra.mrb[0].mxu0 %v1540
        %v1590 = vpop.f32.mrb[0].mxu0
        %v1591 = vadd.f32 0.0, %v1590
        %v1592 = vpop.f32.mrb[0].mxu0
        %v1593 = vpop.f32.mrb[0].mxu0
        %v1594 = vadd.f32 0.0, %v1593
        %v1595 = vpop.f32.mrb[0].mxu0
        %1596 = vmatprep.mubr.bf16.mxu0 0
        %1597 = vmatmul.mubr.bf16.gmra.mrb[0].mxu0 %v1543
        %v1598 = vpop.f32.mrb[0].mxu0
        %v1599 = vadd.f32 0.0, %v1598
        %v1600 = vpop.f32.mrb[0].mxu0
        %v1601 = vpop.f32.mrb[0].mxu0
        %v1602 = vadd.f32 0.0, %v1601
        %v1603 = vpop.f32.mrb[0].mxu0
        %1604 = vmatprep.mubr.bf16.mxu0 0
        %1605 = vmatmul.mubr.bf16.gmra.mrb[0].mxu0 %v1546
        %v1606 = vpop.f32.mrb[0].mxu0
        %v1607 = vadd.f32 0.0, %v1606
        %v1608 = vpop.f32.mrb[0].mxu0
        %v1609 = vpop.f32.mrb[0].mxu0
        %v1610 = vadd.f32 0.0, %v1609
        %v1611 = vpop.f32.mrb[0].mxu0
        %1612 = vdwg.mxu0
        %v1613 = vpack.c.bf16 %v1586, %v1583
        %v1614 = vpack.c.bf16 %v1594, %v1591
        %v1615 = vpack.c.bf16 %v1602, %v1599
        %v1616 = vpack.c.bf16 %v1610, %v1607
        %v1621 = vunpack.c.l.b16 %v574
        %v1622 = vunpack.c.l.b16 %v575
        %v1623 = vunpack.c.l.b16 %v576
        %v1624 = vunpack.c.l.b16 %v577
        %v1625 = vpack.c.b16 %v1622, %v1621
        %v1626 = vpack.c.b16 %v1624, %v1623
        %v1630 = vsel %vm583, %v1613, 0
        %v1633 = vsel %vm583, %v1614, 0
        %v1636 = vsel %vm583, %v1615, 0
        %v1639 = vsel %vm583, %v1616, 0
        %1641 = vmatprep.subr.bf16.mxu0 0
        %1642 = vmatpush1.bf16.msra.mxu0 %v1625
        %1643 = vmatprep.subr.bf16.mxu0 0
        %1644 = vmatpush1.bf16.msra.mxu0 %v1626
        %1645 = vmatprep.subr.bf16.mxu0 0
        %1646 = vmatpush1.bf16.msra.mxu0 0
        %1647 = vmatprep.subr.bf16.mxu0 0
        %1648 = vmatpush1.bf16.msra.mxu0 0
        %1649 = vmatprep.subr.bf16.mxu0 0
        %1650 = vmatpush1.bf16.msra.mxu0 0
        %1651 = vmatprep.subr.bf16.mxu0 0
        %1652 = vmatpush1.bf16.msra.mxu0 0
        %1653 = vmatprep.subr.bf16.mxu0 0
        %1654 = vmatpush1.bf16.msra.mxu0 0
        %1655 = vmatprep.subr.bf16.mxu0 0
        %1656 = vmatpush1.bf16.msra.mxu0 0
        %1657 = vmatprep.subr.bf16.mxu0 0
        %1658 = vmatpush1.bf16.msra.mxu0 0
        %1659 = vmatprep.subr.bf16.mxu0 0
        %1660 = vmatpush1.bf16.msra.mxu0 0
        %1661 = vmatprep.subr.bf16.mxu0 0
        %1662 = vmatpush1.bf16.msra.mxu0 0
        %1663 = vmatprep.subr.bf16.mxu0 0
        %1664 = vmatpush1.bf16.msra.mxu0 0
        %1665 = vmatprep.subr.bf16.mxu0 0
        %1666 = vmatpush1.bf16.msra.mxu0 0
        %1667 = vmatprep.subr.bf16.mxu0 0
        %1668 = vmatpush1.bf16.msra.mxu0 0
        %1669 = vmatprep.subr.bf16.mxu0 0
        %1670 = vmatpush1.bf16.msra.mxu0 0
        %1671 = vmatprep.subr.bf16.mxu0 0
        %1672 = vmatpush1.bf16.msra.mxu0 0
        %1673 = vmatprep.mubr.bf16.mxu0 0
        %1674 = vmatmul.mubr.bf16.gmra.mrb[0].mxu0 %v1630
        %v1675 = vpop.f32.mrb[0].mxu0
        %v1676 = vadd.f32 0.0, %v1675
        %v1677 = vpop.f32.mrb[0].mxu0
        %v1678 = vpop.f32.mrb[0].mxu0
        %v1679 = vadd.f32 0.0, %v1678
        %v1680 = vpop.f32.mrb[0].mxu0
        %1681 = vmatprep.mubr.bf16.mxu0 0
        %1682 = vmatmul.mubr.bf16.gmra.mrb[0].mxu0 %v1633
        %v1683 = vpop.f32.mrb[0].mxu0
        %v1684 = vadd.f32 0.0, %v1683
        %v1685 = vpop.f32.mrb[0].mxu0
        %v1686 = vpop.f32.mrb[0].mxu0
        %v1687 = vadd.f32 0.0, %v1686
        %v1688 = vpop.f32.mrb[0].mxu0
        %1689 = vmatprep.mubr.bf16.mxu0 0
        %1690 = vmatmul.mubr.bf16.gmra.mrb[0].mxu0 %v1636
        %v1691 = vpop.f32.mrb[0].mxu0
        %v1692 = vadd.f32 0.0, %v1691
        %v1693 = vpop.f32.mrb[0].mxu0
        %v1694 = vpop.f32.mrb[0].mxu0
        %v1695 = vadd.f32 0.0, %v1694
        %v1696 = vpop.f32.mrb[0].mxu0
        %1697 = vmatprep.mubr.bf16.mxu0 0
        %1698 = vmatmul.mubr.bf16.gmra.mrb[0].mxu0 %v1639
        %v1699 = vpop.f32.mrb[0].mxu0
        %v1700 = vadd.f32 0.0, %v1699
        %v1701 = vpop.f32.mrb[0].mxu0
        %v1702 = vpop.f32.mrb[0].mxu0
        %v1703 = vadd.f32 0.0, %v1702
        %v1704 = vpop.f32.mrb[0].mxu0
        %1705 = vdwg.mxu0
        %v1706 = vadd.f32 %v1297, %v1676
        %v1707 = vadd.f32 %v1300, %v1679
        %v1708 = vadd.f32 %v1305, %v1684
        %v1709 = vadd.f32 %v1308, %v1687
        %v1710 = vadd.f32 %v1313, %v1692
        %v1711 = vadd.f32 %v1316, %v1695
        %v1712 = vadd.f32 %v1321, %v1700
        %v1713 = vadd.f32 %v1324, %v1703
        %1714 = vrot.lane.b32.xlu0 %v527, 32
        %v1715 = vpop.permute.xlu0 %1714
        %1716 = vrot.lane.b32.xlu0 %v530, 32
        %v1717 = vpop.permute.xlu0 %1716
        %1718 = vrot.lane.b32.xlu0 %v533, 32
        %v1719 = vpop.permute.xlu0 %1718
        %1720 = vrot.lane.b32.xlu0 %v536, 32
        %v1721 = vpop.permute.xlu0 %1720
        %1722 = vrot.lane.b32.xlu0 %v528, 32
        %v1723 = vpop.permute.xlu0 %1722
        %1724 = vrot.lane.b32.xlu0 %v531, 32
        %v1725 = vpop.permute.xlu0 %1724
        %1726 = vrot.lane.b32.xlu0 %v534, 32
        %v1727 = vpop.permute.xlu0 %1726
        %1728 = vrot.lane.b32.xlu0 %v537, 32
        %v1729 = vpop.permute.xlu0 %1728
        %v1731 = vsel %vm583, %v1715, 0
        %v1734 = vsel %vm583, %v1717, 0
        %v1737 = vsel %vm583, %v1719, 0
        %v1740 = vsel %vm583, %v1721, 0
        %v1743 = vsel %vm583, %v1723, 0
        %v1746 = vsel %vm583, %v1725, 0
        %v1749 = vsel %vm583, %v1727, 0
        %v1752 = vsel %vm583, %v1729, 0
        %1754 = vmatprep.subr.bf16.mxu0 0
        %1755 = vmatpush1.bf16.xpose.msra.mxu0 %v1743
        %1756 = vmatprep.subr.bf16.mxu0 0
        %1757 = vmatpush1.bf16.xpose.msra.mxu0 %v1746
        %1758 = vmatprep.subr.bf16.mxu0 0
        %1759 = vmatpush1.bf16.xpose.msra.mxu0 %v1749
        %1760 = vmatprep.subr.bf16.mxu0 0
        %1761 = vmatpush1.bf16.xpose.msra.mxu0 %v1752
        %1762 = vmatprep.subr.bf16.mxu0 0
        %1763 = vmatpush1.bf16.xpose.msra.mxu0 0
        %1764 = vmatprep.subr.bf16.mxu0 0
        %1765 = vmatpush1.bf16.xpose.msra.mxu0 0
        %1766 = vmatprep.subr.bf16.mxu0 0
        %1767 = vmatpush1.bf16.xpose.msra.mxu0 0
        %1768 = vmatprep.subr.bf16.mxu0 0
        %1769 = vmatpush1.bf16.xpose.msra.mxu0 0
        %1770 = vmatprep.subr.bf16.mxu0 0
        %1771 = vmatpush1.bf16.xpose.msra.mxu0 0
        %1772 = vmatprep.subr.bf16.mxu0 0
        %1773 = vmatpush1.bf16.xpose.msra.mxu0 0
        %1774 = vmatprep.subr.bf16.mxu0 0
        %1775 = vmatpush1.bf16.xpose.msra.mxu0 0
        %1776 = vmatprep.subr.bf16.mxu0 0
        %1777 = vmatpush1.bf16.xpose.msra.mxu0 0
        %1778 = vmatprep.subr.bf16.mxu0 0
        %1779 = vmatpush1.bf16.xpose.msra.mxu0 0
        %1780 = vmatprep.subr.bf16.mxu0 0
        %1781 = vmatpush1.bf16.xpose.msra.mxu0 0
        %1782 = vmatprep.subr.bf16.mxu0 0
        %1783 = vmatpush1.bf16.xpose.msra.mxu0 0
        %1784 = vmatprep.subr.bf16.mxu0 0
        %1785 = vmatpush1.bf16.xpose.msra.mxu0 0
        %1786 = vmatprep.mubr.bf16.mxu0 0
        %1787 = vmatmul.mubr.bf16.gmra.mrb[0].mxu0 %v1731
        %v1788 = vpop.f32.mrb[0].mxu0
        %v1789 = vadd.f32 %v558, %v1788
        %v1790 = vpop.f32.mrb[0].mxu0
        %v1791 = vpop.f32.mrb[0].mxu0
        %v1792 = vadd.f32 %v559, %v1791
        %v1793 = vpop.f32.mrb[0].mxu0
        %1794 = vmatprep.mubr.bf16.mxu0 0
        %1795 = vmatmul.mubr.bf16.gmra.mrb[0].mxu0 %v1734
        %v1796 = vpop.f32.mrb[0].mxu0
        %v1797 = vadd.f32 %v560, %v1796
        %v1798 = vpop.f32.mrb[0].mxu0
        %v1799 = vpop.f32.mrb[0].mxu0
        %v1800 = vadd.f32 %v561, %v1799
        %v1801 = vpop.f32.mrb[0].mxu0
        %1802 = vmatprep.mubr.bf16.mxu0 0
        %1803 = vmatmul.mubr.bf16.gmra.mrb[0].mxu0 %v1737
        %v1804 = vpop.f32.mrb[0].mxu0
        %v1805 = vadd.f32 %v562, %v1804
        %v1806 = vpop.f32.mrb[0].mxu0
        %v1807 = vpop.f32.mrb[0].mxu0
        %v1808 = vadd.f32 %v563, %v1807
        %v1809 = vpop.f32.mrb[0].mxu0
        %1810 = vmatprep.mubr.bf16.mxu0 0
        %1811 = vmatmul.mubr.bf16.gmra.mrb[0].mxu0 %v1740
        %v1812 = vpop.f32.mrb[0].mxu0
        %v1813 = vadd.f32 %v564, %v1812
        %v1814 = vpop.f32.mrb[0].mxu0
        %v1815 = vpop.f32.mrb[0].mxu0
        %v1816 = vadd.f32 %v565, %v1815
        %v1817 = vpop.f32.mrb[0].mxu0
        %1818 = vdwg.mxu0
        %v1819 = vsel %vm673, %v1789, -inf
        %1820 = vmax.xlane.f32.xlu0 %v1819
        %v1821 = vpop.xlane.xlu0 %1820
        %v1822 = vsel %vm673, %v1792, -inf
        %1823 = vmax.xlane.f32.xlu0 %v1822
        %v1824 = vpop.xlane.xlu0 %1823
        %v1825 = vsel %vm673, %v1797, -inf
        %1826 = vmax.xlane.f32.xlu0 %v1825
        %v1827 = vpop.xlane.xlu0 %1826
        %v1828 = vsel %vm673, %v1800, -inf
        %1829 = vmax.xlane.f32.xlu0 %v1828
        %v1830 = vpop.xlane.xlu0 %1829
        %v1831 = vsel %vm673, %v1805, -inf
        %1832 = vmax.xlane.f32.xlu0 %v1831
        %v1833 = vpop.xlane.xlu0 %1832
        %v1834 = vsel %vm673, %v1808, -inf
        %1835 = vmax.xlane.f32.xlu0 %v1834
        %v1836 = vpop.xlane.xlu0 %1835
        %v1837 = vsel %vm673, %v1813, -inf
        %1838 = vmax.xlane.f32.xlu0 %v1837
        %v1839 = vpop.xlane.xlu0 %1838
        %v1840 = vsel %vm673, %v1816, -inf
        %1841 = vmax.xlane.f32.xlu0 %v1840
        %v1842 = vpop.xlane.xlu0 %1841
        %v1843 = vsub.f32 %v1789, %v1821
        %v1844 = vsub.f32 %v1792, %v1824
        %v1845 = vsub.f32 %v1797, %v1827
        %v1846 = vsub.f32 %v1800, %v1830
        %v1847 = vsub.f32 %v1805, %v1833
        %v1848 = vsub.f32 %v1808, %v1836
        %v1849 = vsub.f32 %v1813, %v1839
        %v1850 = vsub.f32 %v1816, %v1842
        %v1851 = vmul.f32 %v1843, 1.442695
        %v1852 = vpow.pop %v1851
        %v1853 = vmul.f32 %v1844, 1.442695
        %v1854 = vpow.pop %v1853
        %v1855 = vmul.f32 %v1845, 1.442695
        %v1856 = vpow.pop %v1855
        %v1857 = vmul.f32 %v1846, 1.442695
        %v1858 = vpow.pop %v1857
        %v1859 = vmul.f32 %v1847, 1.442695
        %v1860 = vpow.pop %v1859
        %v1861 = vmul.f32 %v1848, 1.442695
        %v1862 = vpow.pop %v1861
        %v1863 = vmul.f32 %v1849, 1.442695
        %v1864 = vpow.pop %v1863
        %v1865 = vmul.f32 %v1850, 1.442695
        %v1866 = vpow.pop %v1865
        %v1867 = vsel %vm673, %v1852, 0.0
        %1868 = vadd.xlane.f32.xlu0 %v1867
        %v1869 = vpop.xlane.xlu0 %1868
        %v1870 = vsel %vm673, %v1854, 0.0
        %1871 = vadd.xlane.f32.xlu0 %v1870
        %v1872 = vpop.xlane.xlu0 %1871
        %v1873 = vsel %vm673, %v1856, 0.0
        %1874 = vadd.xlane.f32.xlu0 %v1873
        %v1875 = vpop.xlane.xlu0 %1874
        %v1876 = vsel %vm673, %v1858, 0.0
        %1877 = vadd.xlane.f32.xlu0 %v1876
        %v1878 = vpop.xlane.xlu0 %1877
        %v1879 = vsel %vm673, %v1860, 0.0
        %1880 = vadd.xlane.f32.xlu0 %v1879
        %v1881 = vpop.xlane.xlu0 %1880
        %v1882 = vsel %vm673, %v1862, 0.0
        %1883 = vadd.xlane.f32.xlu0 %v1882
        %v1884 = vpop.xlane.xlu0 %1883
        %v1885 = vsel %vm673, %v1864, 0.0
        %1886 = vadd.xlane.f32.xlu0 %v1885
        %v1887 = vpop.xlane.xlu0 %1886
        %v1888 = vsel %vm673, %v1866, 0.0
        %1889 = vadd.xlane.f32.xlu0 %v1888
        %v1890 = vpop.xlane.xlu0 %1889
        %v1891 = vrcp.pop %v1869
        %v1892 = vrcp.pop %v1872
        %v1893 = vrcp.pop %v1875
        %v1894 = vrcp.pop %v1878
        %v1895 = vrcp.pop %v1881
        %v1896 = vrcp.pop %v1884
        %v1897 = vrcp.pop %v1887
        %v1898 = vrcp.pop %v1890
        %v1899 = vmul.f32 %v1852, %v1891
        %v1900 = vmul.f32 %v1854, %v1892
        %v1901 = vmul.f32 %v1856, %v1893
        %v1902 = vmul.f32 %v1858, %v1894
        %v1903 = vmul.f32 %v1860, %v1895
        %v1904 = vmul.f32 %v1862, %v1896
        %v1905 = vmul.f32 %v1864, %v1897
        %v1906 = vmul.f32 %v1866, %v1898
        %v1907 = vpack.c.bf16 %v1900, %v1899
        %v1908 = vpack.c.bf16 %v1902, %v1901
        %v1909 = vpack.c.bf16 %v1904, %v1903
        %v1910 = vpack.c.bf16 %v1906, %v1905
        %1911 = vrot.lane.b32.xlu0 %v529, 32
        %v1912 = vpop.permute.xlu0 %1911
        %1913 = vrot.lane.b32.xlu0 %v532, 32
        %v1914 = vpop.permute.xlu0 %1913
        %1915 = vrot.lane.b32.xlu0 %v535, 32
        %v1916 = vpop.permute.xlu0 %1915
        %1917 = vrot.lane.b32.xlu0 %v538, 32
        %v1918 = vpop.permute.xlu0 %1917
        %v1924 = vsel %vm673, %v1907, 0
        %v1927 = vsel %vm673, %v1908, 0
        %v1930 = vsel %vm673, %v1909, 0
        %v1933 = vsel %vm673, %v1910, 0
        %1935 = vmatprep.subr.bf16.mxu0 0
        %1936 = vmatpush1.bf16.msra.mxu0 %v1912
        %1937 = vmatprep.subr.bf16.mxu0 0
        %1938 = vmatpush1.bf16.msra.mxu0 %v1914
        %1939 = vmatprep.subr.bf16.mxu0 0
        %1940 = vmatpush1.bf16.msra.mxu0 %v1916
        %1941 = vmatprep.subr.bf16.mxu0 0
        %1942 = vmatpush1.bf16.msra.mxu0 %v1918
        %1943 = vmatprep.subr.bf16.mxu0 0
        %1944 = vmatpush1.bf16.msra.mxu0 0
        %1945 = vmatprep.subr.bf16.mxu0 0
        %1946 = vmatpush1.bf16.msra.mxu0 0
        %1947 = vmatprep.subr.bf16.mxu0 0
        %1948 = vmatpush1.bf16.msra.mxu0 0
        %1949 = vmatprep.subr.bf16.mxu0 0
        %1950 = vmatpush1.bf16.msra.mxu0 0
        %1951 = vmatprep.subr.bf16.mxu0 0
        %1952 = vmatpush1.bf16.msra.mxu0 0
        %1953 = vmatprep.subr.bf16.mxu0 0
        %1954 = vmatpush1.bf16.msra.mxu0 0
        %1955 = vmatprep.subr.bf16.mxu0 0
        %1956 = vmatpush1.bf16.msra.mxu0 0
        %1957 = vmatprep.subr.bf16.mxu0 0
        %1958 = vmatpush1.bf16.msra.mxu0 0
        %1959 = vmatprep.subr.bf16.mxu0 0
        %1960 = vmatpush1.bf16.msra.mxu0 0
        %1961 = vmatprep.subr.bf16.mxu0 0
        %1962 = vmatpush1.bf16.msra.mxu0 0
        %1963 = vmatprep.subr.bf16.mxu0 0
        %1964 = vmatpush1.bf16.msra.mxu0 0
        %1965 = vmatprep.subr.bf16.mxu0 0
        %1966 = vmatpush1.bf16.msra.mxu0 0
        %1967 = vmatprep.mubr.bf16.mxu0 0
        %1968 = vmatmul.mubr.bf16.gmra.mrb[0].mxu0 %v1924
        %v1969 = vpop.f32.mrb[0].mxu0
        %v1970 = vadd.f32 0.0, %v1969
        %v1971 = vpop.f32.mrb[0].mxu0
        %v1972 = vpop.f32.mrb[0].mxu0
        %v1973 = vadd.f32 0.0, %v1972
        %v1974 = vpop.f32.mrb[0].mxu0
        %1975 = vmatprep.mubr.bf16.mxu0 0
        %1976 = vmatmul.mubr.bf16.gmra.mrb[0].mxu0 %v1927
        %v1977 = vpop.f32.mrb[0].mxu0
        %v1978 = vadd.f32 0.0, %v1977
        %v1979 = vpop.f32.mrb[0].mxu0
        %v1980 = vpop.f32.mrb[0].mxu0
        %v1981 = vadd.f32 0.0, %v1980
        %v1982 = vpop.f32.mrb[0].mxu0
        %1983 = vmatprep.mubr.bf16.mxu0 0
        %1984 = vmatmul.mubr.bf16.gmra.mrb[0].mxu0 %v1930
        %v1985 = vpop.f32.mrb[0].mxu0
        %v1986 = vadd.f32 0.0, %v1985
        %v1987 = vpop.f32.mrb[0].mxu0
        %v1988 = vpop.f32.mrb[0].mxu0
        %v1989 = vadd.f32 0.0, %v1988
        %v1990 = vpop.f32.mrb[0].mxu0
        %1991 = vmatprep.mubr.bf16.mxu0 0
        %1992 = vmatmul.mubr.bf16.gmra.mrb[0].mxu0 %v1933
        %v1993 = vpop.f32.mrb[0].mxu0
        %v1994 = vadd.f32 0.0, %v1993
        %v1995 = vpop.f32.mrb[0].mxu0
        %v1996 = vpop.f32.mrb[0].mxu0
        %v1997 = vadd.f32 0.0, %v1996
        %v1998 = vpop.f32.mrb[0].mxu0
        %1999 = vdwg.mxu0
        %v2000 = vpack.c.bf16 %v1973, %v1970
        %v2001 = vpack.c.bf16 %v1981, %v1978
        %v2002 = vpack.c.bf16 %v1989, %v1986
        %v2003 = vpack.c.bf16 %v1997, %v1994
        %v2008 = vunpack.c.l.b16 %v578
        %v2009 = vunpack.c.l.b16 %v579
        %v2010 = vunpack.c.l.b16 %v580
        %v2011 = vunpack.c.l.b16 %v581
        %v2012 = vpack.c.b16 %v2009, %v2008
        %v2013 = vpack.c.b16 %v2011, %v2010
        %v2017 = vsel %vm583, %v2000, 0
        %v2020 = vsel %vm583, %v2001, 0
        %v2023 = vsel %vm583, %v2002, 0
        %v2026 = vsel %vm583, %v2003, 0
        %2028 = vmatprep.subr.bf16.mxu0 0
        %2029 = vmatpush1.bf16.msra.mxu0 %v2012
        %2030 = vmatprep.subr.bf16.mxu0 0
        %2031 = vmatpush1.bf16.msra.mxu0 %v2013
        %2032 = vmatprep.subr.bf16.mxu0 0
        %2033 = vmatpush1.bf16.msra.mxu0 0
        %2034 = vmatprep.subr.bf16.mxu0 0
        %2035 = vmatpush1.bf16.msra.mxu0 0
        %2036 = vmatprep.subr.bf16.mxu0 0
        %2037 = vmatpush1.bf16.msra.mxu0 0
        %2038 = vmatprep.subr.bf16.mxu0 0
        %2039 = vmatpush1.bf16.msra.mxu0 0
        %2040 = vmatprep.subr.bf16.mxu0 0
        %2041 = vmatpush1.bf16.msra.mxu0 0
        %2042 = vmatprep.subr.bf16.mxu0 0
        %2043 = vmatpush1.bf16.msra.mxu0 0
        %2044 = vmatprep.subr.bf16.mxu0 0
        %2045 = vmatpush1.bf16.msra.mxu0 0
        %2046 = vmatprep.subr.bf16.mxu0 0
        %2047 = vmatpush1.bf16.msra.mxu0 0
        %2048 = vmatprep.subr.bf16.mxu0 0
        %2049 = vmatpush1.bf16.msra.mxu0 0
        %2050 = vmatprep.subr.bf16.mxu0 0
        %2051 = vmatpush1.bf16.msra.mxu0 0
        %2052 = vmatprep.subr.bf16.mxu0 0
        %2053 = vmatpush1.bf16.msra.mxu0 0
        %2054 = vmatprep.subr.bf16.mxu0 0
        %2055 = vmatpush1.bf16.msra.mxu0 0
        %2056 = vmatprep.subr.bf16.mxu0 0
        %2057 = vmatpush1.bf16.msra.mxu0 0
        %2058 = vmatprep.subr.bf16.mxu0 0
        %2059 = vmatpush1.bf16.msra.mxu0 0
        %2060 = vmatprep.mubr.bf16.mxu0 0
        %2061 = vmatmul.mubr.bf16.gmra.mrb[0].mxu0 %v2017
        %v2062 = vpop.f32.mrb[0].mxu0
        %v2063 = vadd.f32 0.0, %v2062
        %v2064 = vpop.f32.mrb[0].mxu0
        %v2065 = vpop.f32.mrb[0].mxu0
        %v2066 = vadd.f32 0.0, %v2065
        %v2067 = vpop.f32.mrb[0].mxu0
        %2068 = vmatprep.mubr.bf16.mxu0 0
        %2069 = vmatmul.mubr.bf16.gmra.mrb[0].mxu0 %v2020
        %v2070 = vpop.f32.mrb[0].mxu0
        %v2071 = vadd.f32 0.0, %v2070
        %v2072 = vpop.f32.mrb[0].mxu0
        %v2073 = vpop.f32.mrb[0].mxu0
        %v2074 = vadd.f32 0.0, %v2073
        %v2075 = vpop.f32.mrb[0].mxu0
        %2076 = vmatprep.mubr.bf16.mxu0 0
        %2077 = vmatmul.mubr.bf16.gmra.mrb[0].mxu0 %v2023
        %v2078 = vpop.f32.mrb[0].mxu0
        %v2079 = vadd.f32 0.0, %v2078
        %v2080 = vpop.f32.mrb[0].mxu0
        %v2081 = vpop.f32.mrb[0].mxu0
        %v2082 = vadd.f32 0.0, %v2081
        %v2083 = vpop.f32.mrb[0].mxu0
        %2084 = vmatprep.mubr.bf16.mxu0 0
        %2085 = vmatmul.mubr.bf16.gmra.mrb[0].mxu0 %v2026
        %v2086 = vpop.f32.mrb[0].mxu0
        %v2087 = vadd.f32 0.0, %v2086
        %v2088 = vpop.f32.mrb[0].mxu0
        %v2089 = vpop.f32.mrb[0].mxu0
        %v2090 = vadd.f32 0.0, %v2089
        %v2091 = vpop.f32.mrb[0].mxu0
        %2092 = vdwg.mxu0
        %v2093 = vadd.f32 %v1706, %v2063
        %v2094 = vadd.f32 %v1707, %v2066
        %v2095 = vadd.f32 %v1708, %v2071
        %v2096 = vadd.f32 %v1709, %v2074
        %v2097 = vadd.f32 %v1710, %v2079
        %v2098 = vadd.f32 %v1711, %v2082
        %v2099 = vadd.f32 %v1712, %v2087
        %v2100 = vadd.f32 %v1713, %v2090
        %v2102 = vlaneseq
        %v2103 = vshrl.u32 %v2102, 7
        %v2104 = vsub.s32 0, %v2103
        %v2105 = vrot.slane %v582, %v2104
        %v2107 = vadd.f32 %v2093, %v2105
        %v2108 = vadd.f32 %v2094, %v2105
        %v2109 = vadd.f32 %v2095, %v2105
        %v2110 = vadd.f32 %v2096, %v2105
        %v2111 = vadd.f32 %v2097, %v2105
        %v2112 = vadd.f32 %v2098, %v2105
        %v2113 = vadd.f32 %v2099, %v2105
        %v2114 = vadd.f32 %v2100, %v2105
        %2115 = vst [vmem:[%s190] sm:$0xff] %v2107
        %2116 = vst [vmem:[%s190 + $0x8] sm:$0xff] %v2108
        %2117 = vst [vmem:[%s190 + $0x10] sm:$0xff] %v2109
        %2118 = vst [vmem:[%s190 + $0x18] sm:$0xff] %v2110
        %2119 = vst [vmem:[%s190 + $0x20] sm:$0xff] %v2111
        %2120 = vst [vmem:[%s190 + $0x28] sm:$0xff] %v2112
        %2121 = vst [vmem:[%s190 + $0x30] sm:$0xff] %v2113
        %2122 = vst [vmem:[%s190 + $0x38] sm:$0xff] %v2114
        %s2123 = sand.u32 %s115, 1
        %s2124 = scalar_lea.sflag [#allocation3], %s2123
        %s2125 = sand.u32 %s115, 1
        %s2126 = smul.addr %s2125, 64
        %s2127 = scalar_lea.vmem [#allocation2], %s2126
        // Predicated region
        $region37: #{multi_head_attention.1} parent=35 // pred_check
          %p2128 = pneg %p125
        $region38: #{multi_head_attention.1} parent=35 // pred_check_branch
          %2130 = sbr.rel (%p2128) target = $region40
        $region39: #{multi_head_attention.1} parent=35 // pred_region
          %s2132 = ssub.s32 1024, 1024
          %2133 = vsyncadd %s2124, %s2132
          %s2134 = smul.addr %s18, 8
          %s2135 = smul.addr %s2134, 128
          %s2136 = scalar_lea.hbm %s4, %s2135
          %s2137 = sshll.u32 %s2127, 4
          %s2138 = int_to_ptr.vmem [resolvable:$true] %s2137
          %2143 = dma.vmem_to_hbm [thread:$0]  %s2138, 1024, %s2136, %s2124, 128, 128, 8
        $region40: #{multi_head_attention.1} parent=35 // pred_fallthru
          _
      $region36: #{multi_head_attention.1} parent=5 // pred_fallthru
        _
      %p2144 = scmp.le.s32.totalorder 2, %s13
      // Predicated region
      $region41: #{multi_head_attention.1} parent=5 // pred_check
        %p2145 = pneg %p2144
      $region42: #{multi_head_attention.1} parent=5 // pred_check_branch
        %2147 = sbr.rel (%p2145) target = $region44
      $region43: #{multi_head_attention.1} parent=5 // pred_region
        %s2148 = ssub.s32 %s13, 2
        // Predicated region
        $region45: #{multi_head_attention.1} parent=43 // pred_check
          %p2149 = pneg %p131
        $region46: #{multi_head_attention.1} parent=43 // pred_check_branch
          %2151 = sbr.rel (%p2149) target = $region48
        $region47: #{multi_head_attention.1} parent=43 // pred_region
          %s2152 = sand.u32 %s116, 1
          %s2153 = scalar_lea.sflag [#allocation3], %s2152
          %s2154 = sand.u32 %s116, 1
          %s2155 = smul.addr %s2154, 64
          %s2156 = scalar_lea.vmem [#allocation2], %s2155
          %2157 = dma.done %s2153, 1024
        $region48: #{multi_head_attention.1} parent=43 // pred_fallthru
          _
      $region44: #{multi_head_attention.1} parent=5 // pred_fallthru
        _
    $region6: #{multi_head_attention.1} parent=1 // loop_footer
      %s17 = sadd.s32 1, %s13
    $region7: #{multi_head_attention.1} parent=1 // loop_footer_branch
      %12 = sbr.rel target = $region3
    $region8: #{multi_head_attention.1} parent=1 // loop_exit
      _
    %2158 = vsyncpa [#allocation3], 1
    %s2159 = scalar_lea.sflag [#allocation3], 1
    %2160 = vsyncpa %s2159, 1

</llo_original>
